<compile_context>
chip_gen: v6e
topology: v6e:2x2x1
jax: 0.10.0
libtpu: 0.0.40
codegen_flags: <defaults>
</compile_context>

<pallas_src>
import numpy as np
import jax
import jax.numpy as jnp
from jax.experimental import pallas as pl
from jax.experimental.pallas import tpu as pltpu


# ----------------------------- glue: linear-map builders -----------------------------

def adaptive_avg_pool_matrix(out_size, in_size):
    """Row-stochastic (out_size, in_size) matrix with AdaptiveAvgPool1d semantics."""
    M = np.zeros((out_size, in_size), dtype=np.float32)
    for b in range(out_size):
        start = (b * in_size) // out_size
        end = -(-((b + 1) * in_size) // out_size)  # ceil
        M[b, start:end] = 1.0 / (end - start)
    return M


def bilinear_upsample_matrix(out_size, in_size):
    """(out_size, in_size) 1D bilinear interpolation, align_corners=True."""
    M = np.zeros((out_size, in_size), dtype=np.float32)
    if in_size == 1:
        M[:, 0] = 1.0
        return M
    scale = (in_size - 1) / (out_size - 1)
    for i in range(out_size):
        src = i * scale
        f = min(int(np.floor(src)), in_size - 1)
        frac = src - f
        M[i, f] += 1.0 - frac
        if f + 1 <= in_size - 1:
            M[i, f + 1] += frac
    return M


# ----------------------------- fused Pallas kernel -----------------------------

def make_ppm_kernel(num_bins, C, R):
    """Kernel refs: (x_ref, [poolT, upT, wT, bias] * num_bins, o_ref)."""

    def kernel(*refs):
        x_ref = refs[0]
        o_ref = refs[-1]
        x = x_ref[0]                                # (C, HW) f32
        # Pass-through channels: exact f32 copy (fuses torch.cat's first slab).
        o_ref[0, 0:C, :] = x
        xb = x.astype(jnp.bfloat16)                 # bf16 operand for the MXU
        for i in range(num_bins):                   # static unroll over bins
            pool_ref, up_ref, w_ref, b_ref = refs[1 + 4 * i: 1 + 4 * (i + 1)]
            # Adaptive average pool: (C, HW) @ (HW, B2) -> (C, B2).
            pooled = jnp.dot(xb, pool_ref[...],
                             preferred_element_type=jnp.float32)
            # 1x1 conv with BN scale folded in: (R, C) @ (C, B2) -> (R, B2).
            z = jnp.dot(w_ref[...], pooled.astype(jnp.bfloat16),
                        preferred_element_type=jnp.float32)
            z = jnp.maximum(z + b_ref[...], 0.0)    # BN bias (eval) + ReLU
            # Bilinear upsample (align_corners=True): (R, B2) @ (B2, HW) -> (R, HW).
            out = jnp.dot(z.astype(jnp.bfloat16), up_ref[...],
                          preferred_element_type=jnp.float32)
            c0 = C + i * R
            o_ref[0, c0:c0 + R, :] = out.astype(o_ref.dtype)

    return kernel


def ppm_pallas(x_flat, params, R):
    """x_flat: (N, C, H*W) f32 -> (N, C + len(params)*R, H*W) f32 (NCHW-flattened)."""
    N, C, HW = x_flat.shape
    nb = len(params)
    Ctot = C + nb * R

    in_specs = [pl.BlockSpec((1, C, HW), lambda n: (n, 0, 0))]
    args = [x_flat]
    for p in params:
        B2 = p["poolT_bf"].shape[1]
        in_specs += [
            pl.BlockSpec((HW, B2), lambda n: (0, 0)),
            pl.BlockSpec((B2, HW), lambda n: (0, 0)),
            pl.BlockSpec((R, C), lambda n: (0, 0)),
            pl.BlockSpec((R, 1), lambda n: (0, 0)),
        ]
        args += [p["poolT_bf"], p["upT_bf"], p["wt_bf"], p["bias_col"]]

    return pl.pallas_call(
        make_ppm_kernel(nb, C, R),
        out_shape=jax.ShapeDtypeStruct((N, Ctot, HW), x_flat.dtype),
        grid=(N,),
        in_specs=in_specs,
        out_specs=pl.BlockSpec((1, Ctot, HW), lambda n: (n, 0, 0)),
        compiler_params=pltpu.CompilerParams(
            # batch axis parallel -> both TensorCores get work on v7x
            dimension_semantics=("parallel",),
            # above the 32 MiB default scoped limit, with headroom below
            # v7x's 64 MiB physical VMEM
            vmem_limit_bytes=48 * 1024 * 1024,
        ),
    )(*args)


def ppm_forward(x_nchw, params):
    """(N, C, H, W) -> (N, C + len(bins)*R, H, W). NCHW in and out, no transposes."""
    N, C, H, W = x_nchw.shape
    R = params[0]["wt_bf"].shape[0]
    out_flat = ppm_pallas(x_nchw.reshape(N, C, H * W), params, R)
    return out_flat.reshape(N, -1, H, W)


# ----------------------------- params -----------------------------

def make_params(key, in_dim, reduction_dim, bins, H, W):
    params = []
    eps = 1e-5
    for b in bins:
        key, kw = jax.random.split(key)
        # torch conv weight is (R, C, 1, 1) -> store (R, C).
        w = jax.random.normal(kw, (reduction_dim, in_dim), dtype=jnp.float32) * 0.1
        gamma = 1.0 + 0.1 * jnp.arange(reduction_dim, dtype=jnp.float32)
        beta = 0.01 * jnp.arange(reduction_dim, dtype=jnp.float32)
        running_mean = 0.05 * jnp.arange(reduction_dim, dtype=jnp.float32)
        running_var = 1.0 + 0.02 * jnp.arange(reduction_dim, dtype=jnp.float32)
        scale = gamma / jnp.sqrt(running_var + eps)
        bias = beta - running_mean * scale

        ph = adaptive_avg_pool_matrix(b, H)
        pw = adaptive_avg_pool_matrix(b, W)
        uh = bilinear_upsample_matrix(H, b)
        uw = bilinear_upsample_matrix(W, b)
        pool = jnp.asarray(np.kron(ph, pw))     # (b*b, H*W)
        up = jnp.asarray(np.kron(uh, uw))       # (H*W, b*b)

        params.append(dict(
            # f32 originals (for the PyTorch-semantics reference)
            pool=pool, up=up, w=w, scale=scale, bias=bias,
            # kernel operands: BN scale folded into the conv weight, bf16 for the MXU
            poolT_bf=pool.T.astype(jnp.bfloat16),               # (H*W, b*b)
            upT_bf=up.T.astype(jnp.bfloat16),                   # (b*b, H*W)
            wt_bf=(w * scale[:, None]).astype(jnp.bfloat16),    # (R, C)
            bias_col=bias.reshape(reduction_dim, 1),            # (R, 1) f32
        ))
    return params


# ----------------------------- references (sanity checks) -----------------------------

def ppm_reference_quant(x, params):
    """Mirrors the kernel's bf16 operand rounding exactly (tight check)."""
    N, C, H, W = x.shape
    HW = H * W
    x_flat = x.reshape(N, C, HW)
    xq = x_flat.astype(jnp.bfloat16).astype(jnp.float32)
    outs = [x_flat]
    for p in params:
        poolT = p["poolT_bf"].astype(jnp.float32)
        upT = p["upT_bf"].astype(jnp.float32)
        wt = p["wt_bf"].astype(jnp.float32)
        pooled = jnp.einsum("nch,hb->ncb", xq, poolT)
        pooled = pooled.astype(jnp.bfloat16).astype(jnp.float32)
        z = jnp.einsum("rc,ncb->nrb", wt, pooled) + p["bias_col"][None]
        z = jnp.maximum(z, 0.0).astype(jnp.bfloat16).astype(jnp.float32)
        outs.append(jnp.einsum("nrb,bh->nrh", z, upT))
    return jnp.concatenate(outs, axis=1).reshape(N, -1, H, W)


def ppm_reference_f32(x, params):
    """Pure-f32 PyTorch-equivalent math (loose check: bf16 drift allowed)."""
    N, C, H, W = x.shape
    x_flat = x.reshape(N, C, H * W)
    outs = [x_flat]
    for p in params:
        pooled = jnp.einsum("nch,bh->ncb", x_flat, p["pool"])           # adaptive avg pool
        z = jnp.einsum("rc,ncb->nrb", p["w"], pooled)                   # 1x1 conv
        z = z * p["scale"][None, :, None] + p["bias"][None, :, None]    # BN (eval)
        z = jnp.maximum(z, 0.0)                                         # ReLU
        outs.append(jnp.einsum("nrb,hb->nrh", z, p["up"]))              # bilinear upsample
    return jnp.concatenate(outs, axis=1).reshape(N, -1, H, W)


# ----------------------------- main -----------------------------

if __name__ == "__main__":
    key = jax.random.PRNGKey(0)
    N, C, H, W = 2, 4, 16, 16
    R = 8                      # reduction_dim
    bins = (1, 2, 4)

    key, kx = jax.random.split(key)
    x = jax.random.normal(kx, (N, C, H, W), dtype=jnp.float32)
    params = make_params(key, C, R, bins, H, W)

    out = jax.block_until_ready(ppm_forward(x, params))
    assert out.shape == (N, C + len(bins) * R, H, W), out.shape
    out_np = np.asarray(out)

    # Tight check vs. a reference mirroring the kernel's bf16 quantization.
    ref_q = np.asarray(ppm_reference_quant(x, params))
    assert np.allclose(out_np, ref_q, rtol=5e-3, atol=5e-3), \
        float(np.max(np.abs(out_np - ref_q)))

    # Semantic check vs. pure-f32 PyTorch-equivalent math (bf16 drift allowed).
    ref_f = np.asarray(ppm_reference_f32(x, params))
    assert np.allclose(out_np, ref_f, rtol=3e-2, atol=3e-2), \
        float(np.max(np.abs(out_np - ref_f)))

    print("KERNEL_OK")
</pallas_src>

<mosaic_0001>
module attributes {stable_mosaic.version = 11 : i64} {
  func.func @kernel(%arg0: i32, %arg1: memref<1x4x256xf32, #tpu.memory_space<vmem>>, %arg2: memref<256x1xbf16, #tpu.memory_space<vmem>>, %arg3: memref<1x256xbf16, #tpu.memory_space<vmem>>, %arg4: memref<8x4xbf16, #tpu.memory_space<vmem>>, %arg5: memref<8x1xf32, #tpu.memory_space<vmem>>, %arg6: memref<256x4xbf16, #tpu.memory_space<vmem>>, %arg7: memref<4x256xbf16, #tpu.memory_space<vmem>>, %arg8: memref<8x4xbf16, #tpu.memory_space<vmem>>, %arg9: memref<8x1xf32, #tpu.memory_space<vmem>>, %arg10: memref<256x16xbf16, #tpu.memory_space<vmem>>, %arg11: memref<16x256xbf16, #tpu.memory_space<vmem>>, %arg12: memref<8x4xbf16, #tpu.memory_space<vmem>>, %arg13: memref<8x1xf32, #tpu.memory_space<vmem>>, %arg14: memref<1x28x256xf32, #tpu.memory_space<vmem>>) attributes {dimension_semantics = [#tpu.dimension_semantics<parallel>], iteration_bounds = array<i64: 2>, scalar_prefetch = 0 : i64, scratch_operands = 0 : i64, tpu.core_type = #tpu.core_type<tc>, window_params = [{transform_indices = @transform_0, window_bounds = array<i64: 1, 4, 256>}, {pipeline_mode = #tpu.pipeline_mode<synchronous>, transform_indices = @transform_1, window_bounds = array<i64: 256, 1>}, {pipeline_mode = #tpu.pipeline_mode<synchronous>, transform_indices = @transform_2, window_bounds = array<i64: 1, 256>}, {pipeline_mode = #tpu.pipeline_mode<synchronous>, transform_indices = @transform_3, window_bounds = array<i64: 8, 4>}, {pipeline_mode = #tpu.pipeline_mode<synchronous>, transform_indices = @transform_4, window_bounds = array<i64: 8, 1>}, {pipeline_mode = #tpu.pipeline_mode<synchronous>, transform_indices = @transform_5, window_bounds = array<i64: 256, 4>}, {pipeline_mode = #tpu.pipeline_mode<synchronous>, transform_indices = @transform_6, window_bounds = array<i64: 4, 256>}, {pipeline_mode = #tpu.pipeline_mode<synchronous>, transform_indices = @transform_7, window_bounds = array<i64: 8, 4>}, {pipeline_mode = #tpu.pipeline_mode<synchronous>, transform_indices = @transform_8, window_bounds = array<i64: 8, 1>}, {pipeline_mode = #tpu.pipeline_mode<synchronous>, transform_indices = @transform_9, window_bounds = array<i64: 256, 16>}, {pipeline_mode = #tpu.pipeline_mode<synchronous>, transform_indices = @transform_10, window_bounds = array<i64: 16, 256>}, {pipeline_mode = #tpu.pipeline_mode<synchronous>, transform_indices = @transform_11, window_bounds = array<i64: 8, 4>}, {pipeline_mode = #tpu.pipeline_mode<synchronous>, transform_indices = @transform_12, window_bounds = array<i64: 8, 1>}, {transform_indices = @transform_13, window_bounds = array<i64: 1, 28, 256>}]} {
    %c0 = arith.constant 0 : index
    %c0_0 = arith.constant 0 : index
    %c0_1 = arith.constant 0 : index
    %0 = vector.load %arg1[%c0, %c0_0, %c0_1] : memref<1x4x256xf32, #tpu.memory_space<vmem>>, vector<1x4x256xf32>
    %1 = vector.shape_cast %0 : vector<1x4x256xf32> to vector<4x256xf32>
    %c0_2 = arith.constant 0 : index
    %c0_3 = arith.constant 0 : index
    %c0_4 = arith.constant 0 : index
    %2 = vector.load %arg14[%c0_2, %c0_3, %c0_4] : memref<1x28x256xf32, #tpu.memory_space<vmem>>, vector<1x4x256xf32>
    %3 = vector.shape_cast %2 : vector<1x4x256xf32> to vector<4x256xf32>
    %4 = vector.shape_cast %1 : vector<4x256xf32> to vector<1x4x256xf32>
    tpu.vector_store %arg14[%c0_2, %c0_3, %c0_4], %4 {strides = array<i32>} : memref<1x28x256xf32, #tpu.memory_space<vmem>>, vector<1x4x256xf32>,
    %5 = arith.truncf %1 : vector<4x256xf32> to vector<4x256xbf16>
    %c0_5 = arith.constant 0 : index
    %c0_6 = arith.constant 0 : index
    %6 = vector.load %arg2[%c0_5, %c0_6] : memref<256x1xbf16, #tpu.memory_space<vmem>>, vector<256x1xbf16>
    %cst = arith.constant dense<0.000000e+00> : vector<4x1xf32>
    %7 = tpu.matmul %5, %6, %cst {dimension_numbers = #tpu.dot_dimension_numbers<[1], [0], [0], [1], [0, 0, 1, 1], [], []>} : vector<4x256xbf16>, vector<256x1xbf16>, vector<4x1xf32> -> vector<4x1xf32>
    %c0_7 = arith.constant 0 : index
    %c0_8 = arith.constant 0 : index
    %8 = vector.load %arg4[%c0_7, %c0_8] : memref<8x4xbf16, #tpu.memory_space<vmem>>, vector<8x4xbf16>
    %9 = arith.truncf %7 : vector<4x1xf32> to vector<4x1xbf16>
    %cst_9 = arith.constant dense<0.000000e+00> : vector<8x1xf32>
    %10 = tpu.matmul %8, %9, %cst_9 {dimension_numbers = #tpu.dot_dimension_numbers<[1], [0], [0], [1], [0, 0, 1, 1], [], []>} : vector<8x4xbf16>, vector<4x1xbf16>, vector<8x1xf32> -> vector<8x1xf32>
    %c0_10 = arith.constant 0 : index
    %c0_11 = arith.constant 0 : index
    %11 = vector.load %arg5[%c0_10, %c0_11] : memref<8x1xf32, #tpu.memory_space<vmem>>, vector<8x1xf32>
    %12 = arith.addf %10, %11 : vector<8x1xf32>
    %cst_12 = arith.constant 0.000000e+00 : f32
    %13 = vector.broadcast %cst_12 : f32 to vector<8x1xf32>
    %14 = arith.maximumf %12, %13 : vector<8x1xf32>
    %15 = arith.truncf %14 : vector<8x1xf32> to vector<8x1xbf16>
    %c0_13 = arith.constant 0 : index
    %c0_14 = arith.constant 0 : index
    %16 = vector.load %arg3[%c0_13, %c0_14] : memref<1x256xbf16, #tpu.memory_space<vmem>>, vector<1x256xbf16>
    %cst_15 = arith.constant dense<0.000000e+00> : vector<8x256xf32>
    %17 = tpu.matmul %15, %16, %cst_15 {dimension_numbers = #tpu.dot_dimension_numbers<[1], [0], [0], [1], [0, 0, 1, 1], [], []>} : vector<8x1xbf16>, vector<1x256xbf16>, vector<8x256xf32> -> vector<8x256xf32>
    %c0_16 = arith.constant 0 : index
    %c4 = arith.constant 4 : index
    %c0_17 = arith.constant 0 : index
    %18 = vector.load %arg14[%c0_16, %c4, %c0_17] : memref<1x28x256xf32, #tpu.memory_space<vmem>>, vector<1x8x256xf32>
    %19 = vector.shape_cast %18 : vector<1x8x256xf32> to vector<8x256xf32>
    %20 = vector.shape_cast %17 : vector<8x256xf32> to vector<1x8x256xf32>
    tpu.vector_store %arg14[%c0_16, %c4, %c0_17], %20 {strides = array<i32>} : memref<1x28x256xf32, #tpu.memory_space<vmem>>, vector<1x8x256xf32>,
    %c0_18 = arith.constant 0 : index
    %c0_19 = arith.constant 0 : index
    %21 = vector.load %arg6[%c0_18, %c0_19] : memref<256x4xbf16, #tpu.memory_space<vmem>>, vector<256x4xbf16>
    %cst_20 = arith.constant dense<0.000000e+00> : vector<4x4xf32>
    %22 = tpu.matmul %5, %21, %cst_20 {dimension_numbers = #tpu.dot_dimension_numbers<[1], [0], [0], [1], [0, 0, 1, 1], [], []>} : vector<4x256xbf16>, vector<256x4xbf16>, vector<4x4xf32> -> vector<4x4xf32>
    %c0_21 = arith.constant 0 : index
    %c0_22 = arith.constant 0 : index
    %23 = vector.load %arg8[%c0_21, %c0_22] : memref<8x4xbf16, #tpu.memory_space<vmem>>, vector<8x4xbf16>
    %24 = arith.truncf %22 : vector<4x4xf32> to vector<4x4xbf16>
    %cst_23 = arith.constant dense<0.000000e+00> : vector<8x4xf32>
    %25 = tpu.matmul %23, %24, %cst_23 {dimension_numbers = #tpu.dot_dimension_numbers<[1], [0], [0], [1], [0, 0, 1, 1], [], []>} : vector<8x4xbf16>, vector<4x4xbf16>, vector<8x4xf32> -> vector<8x4xf32>
    %c0_24 = arith.constant 0 : index
    %c0_25 = arith.constant 0 : index
    %26 = vector.load %arg9[%c0_24, %c0_25] : memref<8x1xf32, #tpu.memory_space<vmem>>, vector<8x1xf32>
    %27 = vector.broadcast %26 : vector<8x1xf32> to vector<8x4xf32>
    %28 = arith.addf %25, %27 : vector<8x4xf32>
    %cst_26 = arith.constant 0.000000e+00 : f32
    %29 = vector.broadcast %cst_26 : f32 to vector<8x4xf32>
    %30 = arith.maximumf %28, %29 : vector<8x4xf32>
    %31 = arith.truncf %30 : vector<8x4xf32> to vector<8x4xbf16>
    %c0_27 = arith.constant 0 : index
    %c0_28 = arith.constant 0 : index
    %32 = vector.load %arg7[%c0_27, %c0_28] : memref<4x256xbf16, #tpu.memory_space<vmem>>, vector<4x256xbf16>
    %cst_29 = arith.constant dense<0.000000e+00> : vector<8x256xf32>
    %33 = tpu.matmul %31, %32, %cst_29 {dimension_numbers = #tpu.dot_dimension_numbers<[1], [0], [0], [1], [0, 0, 1, 1], [], []>} : vector<8x4xbf16>, vector<4x256xbf16>, vector<8x256xf32> -> vector<8x256xf32>
    %c0_30 = arith.constant 0 : index
    %c12 = arith.constant 12 : index
    %c0_31 = arith.constant 0 : index
    %34 = vector.load %arg14[%c0_30, %c12, %c0_31] : memref<1x28x256xf32, #tpu.memory_space<vmem>>, vector<1x8x256xf32>
    %35 = vector.shape_cast %34 : vector<1x8x256xf32> to vector<8x256xf32>
    %36 = vector.shape_cast %33 : vector<8x256xf32> to vector<1x8x256xf32>
    tpu.vector_store %arg14[%c0_30, %c12, %c0_31], %36 {strides = array<i32>} : memref<1x28x256xf32, #tpu.memory_space<vmem>>, vector<1x8x256xf32>,
    %c0_32 = arith.constant 0 : index
    %c0_33 = arith.constant 0 : index
    %37 = vector.load %arg10[%c0_32, %c0_33] : memref<256x16xbf16, #tpu.memory_space<vmem>>, vector<256x16xbf16>
    %cst_34 = arith.constant dense<0.000000e+00> : vector<4x16xf32>
    %38 = tpu.matmul %5, %37, %cst_34 {dimension_numbers = #tpu.dot_dimension_numbers<[1], [0], [0], [1], [0, 0, 1, 1], [], []>} : vector<4x256xbf16>, vector<256x16xbf16>, vector<4x16xf32> -> vector<4x16xf32>
    %c0_35 = arith.constant 0 : index
    %c0_36 = arith.constant 0 : index
    %39 = vector.load %arg12[%c0_35, %c0_36] : memref<8x4xbf16, #tpu.memory_space<vmem>>, vector<8x4xbf16>
    %40 = arith.truncf %38 : vector<4x16xf32> to vector<4x16xbf16>
    %cst_37 = arith.constant dense<0.000000e+00> : vector<8x16xf32>
    %41 = tpu.matmul %39, %40, %cst_37 {dimension_numbers = #tpu.dot_dimension_numbers<[1], [0], [0], [1], [0, 0, 1, 1], [], []>} : vector<8x4xbf16>, vector<4x16xbf16>, vector<8x16xf32> -> vector<8x16xf32>
    %c0_38 = arith.constant 0 : index
    %c0_39 = arith.constant 0 : index
    %42 = vector.load %arg13[%c0_38, %c0_39] : memref<8x1xf32, #tpu.memory_space<vmem>>, vector<8x1xf32>
    %43 = vector.broadcast %42 : vector<8x1xf32> to vector<8x16xf32>
    %44 = arith.addf %41, %43 : vector<8x16xf32>
    %cst_40 = arith.constant 0.000000e+00 : f32
    %45 = vector.broadcast %cst_40 : f32 to vector<8x16xf32>
    %46 = arith.maximumf %44, %45 : vector<8x16xf32>
    %47 = arith.truncf %46 : vector<8x16xf32> to vector<8x16xbf16>
    %c0_41 = arith.constant 0 : index
    %c0_42 = arith.constant 0 : index
    %48 = vector.load %arg11[%c0_41, %c0_42] : memref<16x256xbf16, #tpu.memory_space<vmem>>, vector<16x256xbf16>
    %cst_43 = arith.constant dense<0.000000e+00> : vector<8x256xf32>
    %49 = tpu.matmul %47, %48, %cst_43 {dimension_numbers = #tpu.dot_dimension_numbers<[1], [0], [0], [1], [0, 0, 1, 1], [], []>} : vector<8x16xbf16>, vector<16x256xbf16>, vector<8x256xf32> -> vector<8x256xf32>
    %c0_44 = arith.constant 0 : index
    %c20 = arith.constant 20 : index
    %c0_45 = arith.constant 0 : index
    %50 = vector.load %arg14[%c0_44, %c20, %c0_45] : memref<1x28x256xf32, #tpu.memory_space<vmem>>, vector<1x8x256xf32>
    %51 = vector.shape_cast %50 : vector<1x8x256xf32> to vector<8x256xf32>
    %52 = vector.shape_cast %49 : vector<8x256xf32> to vector<1x8x256xf32>
    tpu.vector_store %arg14[%c0_44, %c20, %c0_45], %52 {strides = array<i32>} : memref<1x28x256xf32, #tpu.memory_space<vmem>>, vector<1x8x256xf32>,
    return
  }
  func.func @transform_0(%arg0: i32) -> (i32, i32, i32) {
    %c0_i32 = arith.constant 0 : i32
    %c0_i32_0 = arith.constant 0 : i32
    %c0_i32_1 = arith.constant 0 : i32
    return %arg0, %c0_i32, %c0_i32_0 : i32, i32, i32
  }
  func.func @transform_1(%arg0: i32) -> (i32, i32) {
    %c0_i32 = arith.constant 0 : i32
    %c0_i32_0 = arith.constant 0 : i32
    %c0_i32_1 = arith.constant 0 : i32
    return %c0_i32, %c0_i32_0 : i32, i32
  }
  func.func @transform_2(%arg0: i32) -> (i32, i32) {
    %c0_i32 = arith.constant 0 : i32
    %c0_i32_0 = arith.constant 0 : i32
    %c0_i32_1 = arith.constant 0 : i32
    return %c0_i32, %c0_i32_0 : i32, i32
  }
  func.func @transform_3(%arg0: i32) -> (i32, i32) {
    %c0_i32 = arith.constant 0 : i32
    %c0_i32_0 = arith.constant 0 : i32
    %c0_i32_1 = arith.constant 0 : i32
    return %c0_i32, %c0_i32_0 : i32, i32
  }
  func.func @transform_4(%arg0: i32) -> (i32, i32) {
    %c0_i32 = arith.constant 0 : i32
    %c0_i32_0 = arith.constant 0 : i32
    %c0_i32_1 = arith.constant 0 : i32
    return %c0_i32, %c0_i32_0 : i32, i32
  }
  func.func @transform_5(%arg0: i32) -> (i32, i32) {
    %c0_i32 = arith.constant 0 : i32
    %c0_i32_0 = arith.constant 0 : i32
    %c0_i32_1 = arith.constant 0 : i32
    return %c0_i32, %c0_i32_0 : i32, i32
  }
  func.func @transform_6(%arg0: i32) -> (i32, i32) {
    %c0_i32 = arith.constant 0 : i32
    %c0_i32_0 = arith.constant 0 : i32
    %c0_i32_1 = arith.constant 0 : i32
    return %c0_i32, %c0_i32_0 : i32, i32
  }
  func.func @transform_7(%arg0: i32) -> (i32, i32) {
    %c0_i32 = arith.constant 0 : i32
    %c0_i32_0 = arith.constant 0 : i32
    %c0_i32_1 = arith.constant 0 : i32
    return %c0_i32, %c0_i32_0 : i32, i32
  }
  func.func @transform_8(%arg0: i32) -> (i32, i32) {
    %c0_i32 = arith.constant 0 : i32
    %c0_i32_0 = arith.constant 0 : i32
    %c0_i32_1 = arith.constant 0 : i32
    return %c0_i32, %c0_i32_0 : i32, i32
  }
  func.func @transform_9(%arg0: i32) -> (i32, i32) {
    %c0_i32 = arith.constant 0 : i32
    %c0_i32_0 = arith.constant 0 : i32
    %c0_i32_1 = arith.constant 0 : i32
    return %c0_i32, %c0_i32_0 : i32, i32
  }
  func.func @transform_10(%arg0: i32) -> (i32, i32) {
    %c0_i32 = arith.constant 0 : i32
    %c0_i32_0 = arith.constant 0 : i32
    %c0_i32_1 = arith.constant 0 : i32
    return %c0_i32, %c0_i32_0 : i32, i32
  }
  func.func @transform_11(%arg0: i32) -> (i32, i32) {
    %c0_i32 = arith.constant 0 : i32
    %c0_i32_0 = arith.constant 0 : i32
    %c0_i32_1 = arith.constant 0 : i32
    return %c0_i32, %c0_i32_0 : i32, i32
  }
  func.func @transform_12(%arg0: i32) -> (i32, i32) {
    %c0_i32 = arith.constant 0 : i32
    %c0_i32_0 = arith.constant 0 : i32
    %c0_i32_1 = arith.constant 0 : i32
    return %c0_i32, %c0_i32_0 : i32, i32
  }
  func.func @transform_13(%arg0: i32) -> (i32, i32, i32) {
    %c0_i32 = arith.constant 0 : i32
    %c0_i32_0 = arith.constant 0 : i32
    %c0_i32_1 = arith.constant 0 : i32
    return %arg0, %c0_i32, %c0_i32_0 : i32, i32, i32
  }
}

</mosaic_0001>

<llo_original>
// kernel: tpu_custom_call.1
$region0: #{tpu_custom_call.1}
  #allocation0 [shape = 'u32[]', space=smem, size = 0x4, offset = 0x4, fixed_abs, tag = 'smem constant byte address 0x4 - core index']
  #allocation1 [shape = 'u32[144,128]{1,0:T(1,128)}', space=vmem, size = 0x12000, scoped, tag = 'internal scratch']
  %s0 = inlined_call_operand.vmem [shape: f32[2,4,256], index: 0, kind: input, shape index: {}]
  %s1 = inlined_call_operand.vmem [shape: bf16[256,1], index: 1, kind: input, shape index: {}]
  %s2 = inlined_call_operand.vmem [shape: bf16[1,256], index: 2, kind: input, shape index: {}]
  %s3 = inlined_call_operand.vmem [shape: bf16[8,4], index: 3, kind: input, shape index: {}]
  %s4 = inlined_call_operand.vmem [shape: f32[8,1], index: 4, kind: input, shape index: {}]
  %s5 = inlined_call_operand.vmem [shape: bf16[256,4], index: 5, kind: input, shape index: {}]
  %s6 = inlined_call_operand.vmem [shape: bf16[4,256], index: 6, kind: input, shape index: {}]
  %s7 = inlined_call_operand.vmem [shape: bf16[8,4], index: 7, kind: input, shape index: {}]
  %s8 = inlined_call_operand.vmem [shape: f32[8,1], index: 8, kind: input, shape index: {}]
  %s9 = inlined_call_operand.vmem [shape: bf16[256,16], index: 9, kind: input, shape index: {}]
  %s10 = inlined_call_operand.vmem [shape: bf16[16,256], index: 10, kind: input, shape index: {}]
  %s11 = inlined_call_operand.vmem [shape: bf16[8,4], index: 11, kind: input, shape index: {}]
  %s12 = inlined_call_operand.vmem [shape: f32[8,1], index: 12, kind: input, shape index: {}]
  %s13 = inlined_call_operand.vmem [shape: f32[2,28,256], index: 13, kind: output, shape index: {}]
  %s14 = sld [smem:[#allocation0]]
  $region85: #{tpu_custom_call.1} parent=0
    _
  %s16 = ssub.s32 1, %s14
  %s17 = scalar_select 0, %s16, %s14
  loop: start=0, step=1, limit=4
  $region2: #{tpu_custom_call.1} parent=0 // loop_pre_header
    _
  $region3: #{tpu_custom_call.1} parent=0 // loop_header
    %s19 = sphi 0, %s23
    %p20 = scmp.ge.s32.totalorder %s19, 4
    %s29 = sphi 0, %s31
    %s32 = sphi 0, %s29
    %s33 = sphi 0, %s32
    %s49 = sphi 0, %s33
    %s53 = sphi 0, %s53
    %s55 = sphi 0, %s53
    %s56 = sphi 0, %s55
    %s70 = sphi 0, %s56
    %s74 = sphi 0, %s74
    %s76 = sphi 0, %s74
    %s77 = sphi 0, %s76
    %s91 = sphi 0, %s77
    %s95 = sphi 0, %s95
    %s97 = sphi 0, %s95
    %s98 = sphi 0, %s97
    %s112 = sphi 0, %s98
    %s116 = sphi 0, %s116
    %s118 = sphi 0, %s116
    %s119 = sphi 0, %s118
    %s133 = sphi 0, %s119
    %s137 = sphi 0, %s137
    %s139 = sphi 0, %s137
    %s140 = sphi 0, %s139
    %s154 = sphi 0, %s140
    %s158 = sphi 0, %s158
    %s160 = sphi 0, %s158
    %s161 = sphi 0, %s160
    %s175 = sphi 0, %s161
    %s179 = sphi 0, %s179
    %s181 = sphi 0, %s179
    %s182 = sphi 0, %s181
    %s196 = sphi 0, %s182
    %s200 = sphi 0, %s200
    %s202 = sphi 0, %s200
    %s203 = sphi 0, %s202
    %s217 = sphi 0, %s203
    %s221 = sphi 0, %s221
    %s223 = sphi 0, %s221
    %s224 = sphi 0, %s223
    %s238 = sphi 0, %s224
    %s242 = sphi 0, %s242
    %s244 = sphi 0, %s242
    %s245 = sphi 0, %s244
    %s259 = sphi 0, %s245
    %s263 = sphi 0, %s263
    %s265 = sphi 0, %s263
    %s266 = sphi 0, %s265
    %s280 = sphi 0, %s266
    %s284 = sphi 0, %s284
    %s286 = sphi 0, %s284
    %s287 = sphi 0, %s286
    %s301 = sphi 0, %s287
    %s307 = sphi 0, %s309
    %s310 = sphi 0, %s307
    %s311 = sphi 0, %s310
    %s327 = sphi 0, %s311
  $region4: #{tpu_custom_call.1} parent=0 // loop_header_branch
    %22 = sbr.rel (%p20) target = $region8
  $region5: #{tpu_custom_call.1} parent=0 // loop_body
    %s24 = ssub.s32 %s19, 1
    %s25 = ssub.s32 %s19, 2
    %s26 = sadd.s32 %s19, 1
    %s27 = ssub.s32 %s19, %s26
    %p28 = scmp.eq.s32.totalorder %s27, 0
    %s30 = sadd.s32 %s29, 1
    %s31 = scalar_select %p28, %s29, %s30
    %p34 = pneg %p28
    %p35 = scmp.eq.s32.totalorder %s19, 1
    %p36 = por %p34, %p35
    %p37 = scmp.ne.s32.totalorder %s29, %s32
    %p38 = scmp.eq.s32.totalorder %s19, 0
    %p39 = por %p37, %p38
    %p40 = scmp.ne.s32.totalorder %s29, %s32
    %p41 = scmp.eq.s32.totalorder %s24, 1
    %p42 = por %p40, %p41
    %p43 = scmp.ne.s32.totalorder %s32, %s33
    %p44 = scmp.eq.s32.totalorder %s24, 0
    %p45 = por %p43, %p44
    %p46 = scmp.ne.s32.totalorder %s32, %s33
    %p47 = scmp.eq.s32.totalorder %s25, 1
    %p48 = por %p46, %p47
    %p50 = scmp.ne.s32.totalorder %s33, %s49
    %p51 = scmp.eq.s32.totalorder %s25, 0
    %p52 = por %p50, %p51
    %s54 = sadd.s32 %s53, 1
    %p57 = scmp.eq.s32.totalorder %s19, 1
    %p58 = scmp.ne.s32.totalorder %s53, %s55
    %p59 = scmp.eq.s32.totalorder %s19, 0
    %p60 = por %p58, %p59
    %p61 = scmp.ne.s32.totalorder %s53, %s55
    %p62 = scmp.eq.s32.totalorder %s24, 1
    %p63 = por %p61, %p62
    %p64 = scmp.ne.s32.totalorder %s55, %s56
    %p65 = scmp.eq.s32.totalorder %s24, 0
    %p66 = por %p64, %p65
    %p67 = scmp.ne.s32.totalorder %s55, %s56
    %p68 = scmp.eq.s32.totalorder %s25, 1
    %p69 = por %p67, %p68
    %p71 = scmp.ne.s32.totalorder %s56, %s70
    %p72 = scmp.eq.s32.totalorder %s25, 0
    %p73 = por %p71, %p72
    %s75 = sadd.s32 %s74, 1
    %p78 = scmp.eq.s32.totalorder %s19, 1
    %p79 = scmp.ne.s32.totalorder %s74, %s76
    %p80 = scmp.eq.s32.totalorder %s19, 0
    %p81 = por %p79, %p80
    %p82 = scmp.ne.s32.totalorder %s74, %s76
    %p83 = scmp.eq.s32.totalorder %s24, 1
    %p84 = por %p82, %p83
    %p85 = scmp.ne.s32.totalorder %s76, %s77
    %p86 = scmp.eq.s32.totalorder %s24, 0
    %p87 = por %p85, %p86
    %p88 = scmp.ne.s32.totalorder %s76, %s77
    %p89 = scmp.eq.s32.totalorder %s25, 1
    %p90 = por %p88, %p89
    %p92 = scmp.ne.s32.totalorder %s77, %s91
    %p93 = scmp.eq.s32.totalorder %s25, 0
    %p94 = por %p92, %p93
    %s96 = sadd.s32 %s95, 1
    %p99 = scmp.eq.s32.totalorder %s19, 1
    %p100 = scmp.ne.s32.totalorder %s95, %s97
    %p101 = scmp.eq.s32.totalorder %s19, 0
    %p102 = por %p100, %p101
    %p103 = scmp.ne.s32.totalorder %s95, %s97
    %p104 = scmp.eq.s32.totalorder %s24, 1
    %p105 = por %p103, %p104
    %p106 = scmp.ne.s32.totalorder %s97, %s98
    %p107 = scmp.eq.s32.totalorder %s24, 0
    %p108 = por %p106, %p107
    %p109 = scmp.ne.s32.totalorder %s97, %s98
    %p110 = scmp.eq.s32.totalorder %s25, 1
    %p111 = por %p109, %p110
    %p113 = scmp.ne.s32.totalorder %s98, %s112
    %p114 = scmp.eq.s32.totalorder %s25, 0
    %p115 = por %p113, %p114
    %s117 = sadd.s32 %s116, 1
    %p120 = scmp.eq.s32.totalorder %s19, 1
    %p121 = scmp.ne.s32.totalorder %s116, %s118
    %p122 = scmp.eq.s32.totalorder %s19, 0
    %p123 = por %p121, %p122
    %p124 = scmp.ne.s32.totalorder %s116, %s118
    %p125 = scmp.eq.s32.totalorder %s24, 1
    %p126 = por %p124, %p125
    %p127 = scmp.ne.s32.totalorder %s118, %s119
    %p128 = scmp.eq.s32.totalorder %s24, 0
    %p129 = por %p127, %p128
    %p130 = scmp.ne.s32.totalorder %s118, %s119
    %p131 = scmp.eq.s32.totalorder %s25, 1
    %p132 = por %p130, %p131
    %p134 = scmp.ne.s32.totalorder %s119, %s133
    %p135 = scmp.eq.s32.totalorder %s25, 0
    %p136 = por %p134, %p135
    %s138 = sadd.s32 %s137, 1
    %p141 = scmp.eq.s32.totalorder %s19, 1
    %p142 = scmp.ne.s32.totalorder %s137, %s139
    %p143 = scmp.eq.s32.totalorder %s19, 0
    %p144 = por %p142, %p143
    %p145 = scmp.ne.s32.totalorder %s137, %s139
    %p146 = scmp.eq.s32.totalorder %s24, 1
    %p147 = por %p145, %p146
    %p148 = scmp.ne.s32.totalorder %s139, %s140
    %p149 = scmp.eq.s32.totalorder %s24, 0
    %p150 = por %p148, %p149
    %p151 = scmp.ne.s32.totalorder %s139, %s140
    %p152 = scmp.eq.s32.totalorder %s25, 1
    %p153 = por %p151, %p152
    %p155 = scmp.ne.s32.totalorder %s140, %s154
    %p156 = scmp.eq.s32.totalorder %s25, 0
    %p157 = por %p155, %p156
    %s159 = sadd.s32 %s158, 1
    %p162 = scmp.eq.s32.totalorder %s19, 1
    %p163 = scmp.ne.s32.totalorder %s158, %s160
    %p164 = scmp.eq.s32.totalorder %s19, 0
    %p165 = por %p163, %p164
    %p166 = scmp.ne.s32.totalorder %s158, %s160
    %p167 = scmp.eq.s32.totalorder %s24, 1
    %p168 = por %p166, %p167
    %p169 = scmp.ne.s32.totalorder %s160, %s161
    %p170 = scmp.eq.s32.totalorder %s24, 0
    %p171 = por %p169, %p170
    %p172 = scmp.ne.s32.totalorder %s160, %s161
    %p173 = scmp.eq.s32.totalorder %s25, 1
    %p174 = por %p172, %p173
    %p176 = scmp.ne.s32.totalorder %s161, %s175
    %p177 = scmp.eq.s32.totalorder %s25, 0
    %p178 = por %p176, %p177
    %s180 = sadd.s32 %s179, 1
    %p183 = scmp.eq.s32.totalorder %s19, 1
    %p184 = scmp.ne.s32.totalorder %s179, %s181
    %p185 = scmp.eq.s32.totalorder %s19, 0
    %p186 = por %p184, %p185
    %p187 = scmp.ne.s32.totalorder %s179, %s181
    %p188 = scmp.eq.s32.totalorder %s24, 1
    %p189 = por %p187, %p188
    %p190 = scmp.ne.s32.totalorder %s181, %s182
    %p191 = scmp.eq.s32.totalorder %s24, 0
    %p192 = por %p190, %p191
    %p193 = scmp.ne.s32.totalorder %s181, %s182
    %p194 = scmp.eq.s32.totalorder %s25, 1
    %p195 = por %p193, %p194
    %p197 = scmp.ne.s32.totalorder %s182, %s196
    %p198 = scmp.eq.s32.totalorder %s25, 0
    %p199 = por %p197, %p198
    %s201 = sadd.s32 %s200, 1
    %p204 = scmp.eq.s32.totalorder %s19, 1
    %p205 = scmp.ne.s32.totalorder %s200, %s202
    %p206 = scmp.eq.s32.totalorder %s19, 0
    %p207 = por %p205, %p206
    %p208 = scmp.ne.s32.totalorder %s200, %s202
    %p209 = scmp.eq.s32.totalorder %s24, 1
    %p210 = por %p208, %p209
    %p211 = scmp.ne.s32.totalorder %s202, %s203
    %p212 = scmp.eq.s32.totalorder %s24, 0
    %p213 = por %p211, %p212
    %p214 = scmp.ne.s32.totalorder %s202, %s203
    %p215 = scmp.eq.s32.totalorder %s25, 1
    %p216 = por %p214, %p215
    %p218 = scmp.ne.s32.totalorder %s203, %s217
    %p219 = scmp.eq.s32.totalorder %s25, 0
    %p220 = por %p218, %p219
    %s222 = sadd.s32 %s221, 1
    %p225 = scmp.eq.s32.totalorder %s19, 1
    %p226 = scmp.ne.s32.totalorder %s221, %s223
    %p227 = scmp.eq.s32.totalorder %s19, 0
    %p228 = por %p226, %p227
    %p229 = scmp.ne.s32.totalorder %s221, %s223
    %p230 = scmp.eq.s32.totalorder %s24, 1
    %p231 = por %p229, %p230
    %p232 = scmp.ne.s32.totalorder %s223, %s224
    %p233 = scmp.eq.s32.totalorder %s24, 0
    %p234 = por %p232, %p233
    %p235 = scmp.ne.s32.totalorder %s223, %s224
    %p236 = scmp.eq.s32.totalorder %s25, 1
    %p237 = por %p235, %p236
    %p239 = scmp.ne.s32.totalorder %s224, %s238
    %p240 = scmp.eq.s32.totalorder %s25, 0
    %p241 = por %p239, %p240
    %s243 = sadd.s32 %s242, 1
    %p246 = scmp.eq.s32.totalorder %s19, 1
    %p247 = scmp.ne.s32.totalorder %s242, %s244
    %p248 = scmp.eq.s32.totalorder %s19, 0
    %p249 = por %p247, %p248
    %p250 = scmp.ne.s32.totalorder %s242, %s244
    %p251 = scmp.eq.s32.totalorder %s24, 1
    %p252 = por %p250, %p251
    %p253 = scmp.ne.s32.totalorder %s244, %s245
    %p254 = scmp.eq.s32.totalorder %s24, 0
    %p255 = por %p253, %p254
    %p256 = scmp.ne.s32.totalorder %s244, %s245
    %p257 = scmp.eq.s32.totalorder %s25, 1
    %p258 = por %p256, %p257
    %p260 = scmp.ne.s32.totalorder %s245, %s259
    %p261 = scmp.eq.s32.totalorder %s25, 0
    %p262 = por %p260, %p261
    %s264 = sadd.s32 %s263, 1
    %p267 = scmp.eq.s32.totalorder %s19, 1
    %p268 = scmp.ne.s32.totalorder %s263, %s265
    %p269 = scmp.eq.s32.totalorder %s19, 0
    %p270 = por %p268, %p269
    %p271 = scmp.ne.s32.totalorder %s263, %s265
    %p272 = scmp.eq.s32.totalorder %s24, 1
    %p273 = por %p271, %p272
    %p274 = scmp.ne.s32.totalorder %s265, %s266
    %p275 = scmp.eq.s32.totalorder %s24, 0
    %p276 = por %p274, %p275
    %p277 = scmp.ne.s32.totalorder %s265, %s266
    %p278 = scmp.eq.s32.totalorder %s25, 1
    %p279 = por %p277, %p278
    %p281 = scmp.ne.s32.totalorder %s266, %s280
    %p282 = scmp.eq.s32.totalorder %s25, 0
    %p283 = por %p281, %p282
    %s285 = sadd.s32 %s284, 1
    %p288 = scmp.eq.s32.totalorder %s19, 1
    %p289 = scmp.ne.s32.totalorder %s284, %s286
    %p290 = scmp.eq.s32.totalorder %s19, 0
    %p291 = por %p289, %p290
    %p292 = scmp.ne.s32.totalorder %s284, %s286
    %p293 = scmp.eq.s32.totalorder %s24, 1
    %p294 = por %p292, %p293
    %p295 = scmp.ne.s32.totalorder %s286, %s287
    %p296 = scmp.eq.s32.totalorder %s24, 0
    %p297 = por %p295, %p296
    %p298 = scmp.ne.s32.totalorder %s286, %s287
    %p299 = scmp.eq.s32.totalorder %s25, 1
    %p300 = por %p298, %p299
    %p302 = scmp.ne.s32.totalorder %s287, %s301
    %p303 = scmp.eq.s32.totalorder %s25, 0
    %p304 = por %p302, %p303
    %s305 = ssub.s32 %s19, %s26
    %p306 = scmp.eq.s32.totalorder %s305, 0
    %s308 = sadd.s32 %s307, 1
    %s309 = scalar_select %p306, %s307, %s308
    %p312 = pneg %p306
    %p313 = scmp.eq.s32.totalorder %s19, 1
    %p314 = por %p312, %p313
    %p315 = scmp.ne.s32.totalorder %s307, %s310
    %p316 = scmp.eq.s32.totalorder %s19, 0
    %p317 = por %p315, %p316
    %p318 = scmp.ne.s32.totalorder %s307, %s310
    %p319 = scmp.eq.s32.totalorder %s24, 1
    %p320 = por %p318, %p319
    %p321 = scmp.ne.s32.totalorder %s310, %s311
    %p322 = scmp.eq.s32.totalorder %s24, 0
    %p323 = por %p321, %p322
    %p324 = scmp.ne.s32.totalorder %s310, %s311
    %p325 = scmp.eq.s32.totalorder %s25, 1
    %p326 = por %p324, %p325
    %p328 = scmp.ne.s32.totalorder %s311, %s327
    %p329 = scmp.eq.s32.totalorder %s25, 0
    %p330 = por %p328, %p329
    %p331 = scmp.le.s32.totalorder 1, %s19
    %p332 = scmp.lt.s32.totalorder %s19, 3
    %p333 = pnand %p331, %p332
    %p334 = pneg %p333
    // Predicated region
    $region9: #{tpu_custom_call.1} parent=5 // pred_check
      _
    $region10: #{tpu_custom_call.1} parent=5 // pred_check_branch
      %336 = sbr.rel (%p333) target = $region12
    $region11: #{tpu_custom_call.1} parent=5 // pred_region
      %s337 = ssub.s32 %s19, 1
      // Predicated region
      $region13: #{tpu_custom_call.1} parent=11 // pred_check
        %p338 = pneg %p66
      $region14: #{tpu_custom_call.1} parent=11 // pred_check_branch
        %340 = sbr.rel (%p338) target = $region16
      $region15: #{tpu_custom_call.1} parent=11 // pred_region
        _
      $region16: #{tpu_custom_call.1} parent=11 // pred_fallthru
        _
      // Predicated region
      $region17: #{tpu_custom_call.1} parent=11 // pred_check
        %p341 = pneg %p87
      $region18: #{tpu_custom_call.1} parent=11 // pred_check_branch
        %343 = sbr.rel (%p341) target = $region20
      $region19: #{tpu_custom_call.1} parent=11 // pred_region
        _
      $region20: #{tpu_custom_call.1} parent=11 // pred_fallthru
        _
      // Predicated region
      $region21: #{tpu_custom_call.1} parent=11 // pred_check
        %p344 = pneg %p108
      $region22: #{tpu_custom_call.1} parent=11 // pred_check_branch
        %346 = sbr.rel (%p344) target = $region24
      $region23: #{tpu_custom_call.1} parent=11 // pred_region
        _
      $region24: #{tpu_custom_call.1} parent=11 // pred_fallthru
        _
      // Predicated region
      $region25: #{tpu_custom_call.1} parent=11 // pred_check
        %p347 = pneg %p129
      $region26: #{tpu_custom_call.1} parent=11 // pred_check_branch
        %349 = sbr.rel (%p347) target = $region28
      $region27: #{tpu_custom_call.1} parent=11 // pred_region
        _
      $region28: #{tpu_custom_call.1} parent=11 // pred_fallthru
        _
      // Predicated region
      $region29: #{tpu_custom_call.1} parent=11 // pred_check
        %p350 = pneg %p150
      $region30: #{tpu_custom_call.1} parent=11 // pred_check_branch
        %352 = sbr.rel (%p350) target = $region32
      $region31: #{tpu_custom_call.1} parent=11 // pred_region
        _
      $region32: #{tpu_custom_call.1} parent=11 // pred_fallthru
        _
      // Predicated region
      $region33: #{tpu_custom_call.1} parent=11 // pred_check
        %p353 = pneg %p171
      $region34: #{tpu_custom_call.1} parent=11 // pred_check_branch
        %355 = sbr.rel (%p353) target = $region36
      $region35: #{tpu_custom_call.1} parent=11 // pred_region
        _
      $region36: #{tpu_custom_call.1} parent=11 // pred_fallthru
        _
      // Predicated region
      $region37: #{tpu_custom_call.1} parent=11 // pred_check
        %p356 = pneg %p192
      $region38: #{tpu_custom_call.1} parent=11 // pred_check_branch
        %358 = sbr.rel (%p356) target = $region40
      $region39: #{tpu_custom_call.1} parent=11 // pred_region
        _
      $region40: #{tpu_custom_call.1} parent=11 // pred_fallthru
        _
      // Predicated region
      $region41: #{tpu_custom_call.1} parent=11 // pred_check
        %p359 = pneg %p213
      $region42: #{tpu_custom_call.1} parent=11 // pred_check_branch
        %361 = sbr.rel (%p359) target = $region44
      $region43: #{tpu_custom_call.1} parent=11 // pred_region
        _
      $region44: #{tpu_custom_call.1} parent=11 // pred_fallthru
        _
      // Predicated region
      $region45: #{tpu_custom_call.1} parent=11 // pred_check
        %p362 = pneg %p234
      $region46: #{tpu_custom_call.1} parent=11 // pred_check_branch
        %364 = sbr.rel (%p362) target = $region48
      $region47: #{tpu_custom_call.1} parent=11 // pred_region
        _
      $region48: #{tpu_custom_call.1} parent=11 // pred_fallthru
        _
      // Predicated region
      $region49: #{tpu_custom_call.1} parent=11 // pred_check
        %p365 = pneg %p255
      $region50: #{tpu_custom_call.1} parent=11 // pred_check_branch
        %367 = sbr.rel (%p365) target = $region52
      $region51: #{tpu_custom_call.1} parent=11 // pred_region
        _
      $region52: #{tpu_custom_call.1} parent=11 // pred_fallthru
        _
      // Predicated region
      $region53: #{tpu_custom_call.1} parent=11 // pred_check
        %p368 = pneg %p276
      $region54: #{tpu_custom_call.1} parent=11 // pred_check_branch
        %370 = sbr.rel (%p368) target = $region56
      $region55: #{tpu_custom_call.1} parent=11 // pred_region
        _
      $region56: #{tpu_custom_call.1} parent=11 // pred_fallthru
        _
      // Predicated region
      $region57: #{tpu_custom_call.1} parent=11 // pred_check
        %p371 = pneg %p297
      $region58: #{tpu_custom_call.1} parent=11 // pred_check_branch
        %373 = sbr.rel (%p371) target = $region60
      $region59: #{tpu_custom_call.1} parent=11 // pred_region
        _
      $region60: #{tpu_custom_call.1} parent=11 // pred_fallthru
        _
    $region12: #{tpu_custom_call.1} parent=5 // pred_fallthru
      _
    %p374 = scmp.lt.s32.totalorder %s19, 2
    // Predicated region
    $region61: #{tpu_custom_call.1} parent=5 // pred_check
      %p375 = pneg %p374
    $region62: #{tpu_custom_call.1} parent=5 // pred_check_branch
      %377 = sbr.rel (%p375) target = $region64
    $region63: #{tpu_custom_call.1} parent=5 // pred_region
      // Predicated region
      $region65: #{tpu_custom_call.1} parent=63 // pred_check
        %p378 = pneg %p39
      $region66: #{tpu_custom_call.1} parent=63 // pred_check_branch
        %380 = sbr.rel (%p378) target = $region68
      $region67: #{tpu_custom_call.1} parent=63 // pred_region
        %p381 = scmp.lt.s32.totalorder %s19, 1
        %s382 = scalar_select %p381, %s19, 1
        %s383 = smul.addr %s382, 2
        %s384 = smul.addr %s383, 4
        %s385 = scalar_lea.vmem %s0, %s384
      $region68: #{tpu_custom_call.1} parent=63 // pred_fallthru
        _
    $region64: #{tpu_custom_call.1} parent=5 // pred_fallthru
      _
    %p386 = scmp.le.s32.totalorder 1, %s19
    %p387 = scmp.lt.s32.totalorder %s19, 3
    %p388 = pnand %p386, %p387
    %p389 = pneg %p388
    // Predicated region
    $region69: #{tpu_custom_call.1} parent=5 // pred_check
      _
    $region70: #{tpu_custom_call.1} parent=5 // pred_check_branch
      %391 = sbr.rel (%p388) target = $region72
    $region71: #{tpu_custom_call.1} parent=5 // pred_region
      %s392 = ssub.s32 %s19, 1
      %p393 = scmp.lt.s32.totalorder %s24, 1
      %s394 = scalar_select %p393, %s24, 1
      %s395 = smul.addr %s394, 2
      %s396 = smul.addr %s395, 4
      %s397 = scalar_lea.vmem %s0, %s396
      %p398 = pneg %p45
      %p399 = pneg %p42
      %p400 = pneg %p66
      %p401 = pneg %p63
      %p402 = pneg %p87
      %p403 = pneg %p84
      %p404 = pneg %p108
      %p405 = pneg %p105
      %p406 = pneg %p129
      %p407 = pneg %p126
      %p408 = pneg %p150
      %p409 = pneg %p147
      %p410 = pneg %p171
      %p411 = pneg %p168
      %p412 = pneg %p192
      %p413 = pneg %p189
      %p414 = pneg %p213
      %p415 = pneg %p210
      %p416 = pneg %p234
      %p417 = pneg %p231
      %p418 = pneg %p255
      %p419 = pneg %p252
      %p420 = pneg %p276
      %p421 = pneg %p273
      %p422 = pneg %p297
      %p423 = pneg %p294
      %p424 = pneg %p323
      %p425 = pneg %p320
      %p426 = scmp.lt.s32.totalorder %s24, 1
      %s427 = scalar_select %p426, %s24, 1
      %s428 = smul.addr %s427, 8
      %s429 = smul.addr %s428, 8
      %s430 = scalar_lea.vmem %s13, %s429
      %p431 = scmp.lt.s32.totalorder %s24, 1
      %s432 = scalar_select %p431, %s24, 1
      %s433 = smul.addr %s432, 2
      %s434 = smul.addr %s433, 4
      %s435 = scalar_lea.vmem %s0, %s434
      %p436 = scmp.lt.s32.totalorder %s24, 1
      %s437 = scalar_select %p436, %s24, 1
      %s438 = smul.addr %s437, 8
      %s439 = smul.addr %s438, 8
      %s440 = scalar_lea.vmem %s13, %s439
      %v442 = vld [vmem:[%s435] sm:$0xff]
      %v444 = vcombine.high %v442, %v442
      %446 = vst [vmem:[%s440] sm:$0xf] %v442
      %447 = vst [vmem:[%s440 + $0x8] sm:$0xf] %v444
      %v448 = vpack.c.bf16 %v442, %v442
      %v449 = vpack.c.bf16 %v444, %v444
      %v450 = vld [vmem:[%s1] sm:$0xf]
      %v451 = vld [vmem:[%s1 + $0x4] sm:$0xf]
      %v452 = vld [vmem:[%s1 + $0x8] sm:$0xf]
      %v453 = vld [vmem:[%s1 + $0xc] sm:$0xf]
      %v454 = vld [vmem:[%s1 + $0x10] sm:$0xf]
      %v455 = vld [vmem:[%s1 + $0x14] sm:$0xf]
      %v456 = vld [vmem:[%s1 + $0x18] sm:$0xf]
      %v457 = vld [vmem:[%s1 + $0x1c] sm:$0xf]
      %v458 = vld [vmem:[%s1 + $0x20] sm:$0xf]
      %v459 = vld [vmem:[%s1 + $0x24] sm:$0xf]
      %v460 = vld [vmem:[%s1 + $0x28] sm:$0xf]
      %v461 = vld [vmem:[%s1 + $0x2c] sm:$0xf]
      %v462 = vld [vmem:[%s1 + $0x30] sm:$0xf]
      %v463 = vld [vmem:[%s1 + $0x34] sm:$0xf]
      %v464 = vld [vmem:[%s1 + $0x38] sm:$0xf]
      %v465 = vld [vmem:[%s1 + $0x3c] sm:$0xf]
      %v466 = vld [vmem:[%s1 + $0x40] sm:$0xf]
      %v467 = vld [vmem:[%s1 + $0x44] sm:$0xf]
      %v468 = vld [vmem:[%s1 + $0x48] sm:$0xf]
      %v469 = vld [vmem:[%s1 + $0x4c] sm:$0xf]
      %v470 = vld [vmem:[%s1 + $0x50] sm:$0xf]
      %v471 = vld [vmem:[%s1 + $0x54] sm:$0xf]
      %v472 = vld [vmem:[%s1 + $0x58] sm:$0xf]
      %v473 = vld [vmem:[%s1 + $0x5c] sm:$0xf]
      %v474 = vld [vmem:[%s1 + $0x60] sm:$0xf]
      %v475 = vld [vmem:[%s1 + $0x64] sm:$0xf]
      %v476 = vld [vmem:[%s1 + $0x68] sm:$0xf]
      %v477 = vld [vmem:[%s1 + $0x6c] sm:$0xf]
      %v478 = vld [vmem:[%s1 + $0x70] sm:$0xf]
      %v479 = vld [vmem:[%s1 + $0x74] sm:$0xf]
      %v480 = vld [vmem:[%s1 + $0x78] sm:$0xf]
      %v481 = vld [vmem:[%s1 + $0x7c] sm:$0xf]
      %v514 = vunpack.c.l.b16 %v450
      %v515 = vunpack.c.l.b16 %v451
      %v516 = vunpack.c.l.b16 %v452
      %v517 = vunpack.c.l.b16 %v453
      %v518 = vunpack.c.l.b16 %v454
      %v519 = vunpack.c.l.b16 %v455
      %v520 = vunpack.c.l.b16 %v456
      %v521 = vunpack.c.l.b16 %v457
      %v522 = vunpack.c.l.b16 %v458
      %v523 = vunpack.c.l.b16 %v459
      %v524 = vunpack.c.l.b16 %v460
      %v525 = vunpack.c.l.b16 %v461
      %v526 = vunpack.c.l.b16 %v462
      %v527 = vunpack.c.l.b16 %v463
      %v528 = vunpack.c.l.b16 %v464
      %v529 = vunpack.c.l.b16 %v465
      %v530 = vunpack.c.l.b16 %v466
      %v531 = vunpack.c.l.b16 %v467
      %v532 = vunpack.c.l.b16 %v468
      %v533 = vunpack.c.l.b16 %v469
      %v534 = vunpack.c.l.b16 %v470
      %v535 = vunpack.c.l.b16 %v471
      %v536 = vunpack.c.l.b16 %v472
      %v537 = vunpack.c.l.b16 %v473
      %v538 = vunpack.c.l.b16 %v474
      %v539 = vunpack.c.l.b16 %v475
      %v540 = vunpack.c.l.b16 %v476
      %v541 = vunpack.c.l.b16 %v477
      %v542 = vunpack.c.l.b16 %v478
      %v543 = vunpack.c.l.b16 %v479
      %v544 = vunpack.c.l.b16 %v480
      %v545 = vunpack.c.l.b16 %v481
      %v546 = vpack.c.b16 %v515, %v514
      %v547 = vpack.c.b16 %v517, %v516
      %v548 = vpack.c.b16 %v519, %v518
      %v549 = vpack.c.b16 %v521, %v520
      %v550 = vpack.c.b16 %v523, %v522
      %v551 = vpack.c.b16 %v525, %v524
      %v552 = vpack.c.b16 %v527, %v526
      %v553 = vpack.c.b16 %v529, %v528
      %v554 = vpack.c.b16 %v531, %v530
      %v555 = vpack.c.b16 %v533, %v532
      %v556 = vpack.c.b16 %v535, %v534
      %v557 = vpack.c.b16 %v537, %v536
      %v558 = vpack.c.b16 %v539, %v538
      %v559 = vpack.c.b16 %v541, %v540
      %v560 = vpack.c.b16 %v543, %v542
      %v561 = vpack.c.b16 %v545, %v544
      %578 = vmatprep.subr.bf16.mxu0 0
      %579 = vmatpush1.bf16.msra.mxu0 %v553
      %580 = vmatprep.subr.bf16.mxu0 0
      %581 = vmatpush1.bf16.msra.mxu0 %v552
      %582 = vmatprep.subr.bf16.mxu0 0
      %583 = vmatpush1.bf16.msra.mxu0 %v551
      %584 = vmatprep.subr.bf16.mxu0 0
      %585 = vmatpush1.bf16.msra.mxu0 %v550
      %586 = vmatprep.subr.bf16.mxu0 0
      %587 = vmatpush1.bf16.msra.mxu0 %v549
      %588 = vmatprep.subr.bf16.mxu0 0
      %589 = vmatpush1.bf16.msra.mxu0 %v548
      %590 = vmatprep.subr.bf16.mxu0 0
      %591 = vmatpush1.bf16.msra.mxu0 %v547
      %592 = vmatprep.subr.bf16.mxu0 0
      %593 = vmatpush1.bf16.msra.mxu0 %v546
      %594 = vmatprep.subr.bf16.mxu0 0
      %595 = vmatpush2.bf16.msra.mxu0 %v561
      %596 = vmatprep.subr.bf16.mxu0 0
      %597 = vmatpush2.bf16.msra.mxu0 %v560
      %598 = vmatprep.subr.bf16.mxu0 0
      %599 = vmatpush2.bf16.msra.mxu0 %v559
      %600 = vmatprep.subr.bf16.mxu0 0
      %601 = vmatpush2.bf16.msra.mxu0 %v558
      %602 = vmatprep.subr.bf16.mxu0 0
      %603 = vmatpush2.bf16.msra.mxu0 %v557
      %604 = vmatprep.subr.bf16.mxu0 0
      %605 = vmatpush2.bf16.msra.mxu0 %v556
      %606 = vmatprep.subr.bf16.mxu0 0
      %607 = vmatpush2.bf16.msra.mxu0 %v555
      %608 = vmatprep.subr.bf16.mxu0 0
      %609 = vmatpush2.bf16.msra.mxu0 %v554
      %610 = vmatprep.mubr.bf16.mxu0 %v449
      %611 = vmatmul.mubr.bf16.gmra.mxu0 %v448
      %v612 = vpop.f32.mrf.mxu0
      %v613 = vadd.f32 0.0, %v612
      %v614 = vpop.f32.mrf.mxu0
      %v615 = vpop.f32.mrf.mxu0
      %v616 = vpop.f32.mrf.mxu0
      %617 = vdwg.mxu0
      %v618 = vld [vmem:[%s3] sm:$0xf]
      %v619 = vpack.c.bf16 %v613, %v613
      %v620 = vld [vmem:[%s4] sm:$0xff]
      %vm621 = vcmask 31744
      %v623 = vsel %vm621, %v618, 0
      %vm625 = vcmask 1041408
      %v627 = vsel %vm625, %v619, 0
      %629 = vmatprep.subr.bf16.mxu0 0
      %630 = vmatpush1.bf16.msra.mxu0 0
      %631 = vmatprep.subr.bf16.mxu0 0
      %632 = vmatpush1.bf16.msra.mxu0 0
      %633 = vmatprep.subr.bf16.mxu0 0
      %634 = vmatpush1.bf16.msra.mxu0 0
      %635 = vmatprep.subr.bf16.mxu0 0
      %636 = vmatpush1.bf16.msra.mxu0 0
      %637 = vmatprep.subr.bf16.mxu0 0
      %638 = vmatpush1.bf16.msra.mxu0 0
      %639 = vmatprep.subr.bf16.mxu0 0
      %640 = vmatpush1.bf16.msra.mxu0 0
      %641 = vmatprep.subr.bf16.mxu0 0
      %642 = vmatpush1.bf16.msra.mxu0 0
      %643 = vmatprep.subr.bf16.mxu0 0
      %644 = vmatpush1.bf16.msra.mxu0 %v627
      %645 = vmatprep.subr.bf16.mxu0 0
      %646 = vmatpush2.bf16.msra.mxu0 0
      %647 = vmatprep.subr.bf16.mxu0 0
      %648 = vmatpush2.bf16.msra.mxu0 0
      %649 = vmatprep.subr.bf16.mxu0 0
      %650 = vmatpush2.bf16.msra.mxu0 0
      %651 = vmatprep.subr.bf16.mxu0 0
      %652 = vmatpush2.bf16.msra.mxu0 0
      %653 = vmatprep.subr.bf16.mxu0 0
      %654 = vmatpush2.bf16.msra.mxu0 0
      %655 = vmatprep.subr.bf16.mxu0 0
      %656 = vmatpush2.bf16.msra.mxu0 0
      %657 = vmatprep.subr.bf16.mxu0 0
      %658 = vmatpush2.bf16.msra.mxu0 0
      %659 = vmatprep.subr.bf16.mxu0 0
      %660 = vmatpush2.bf16.msra.mxu0 0
      %661 = vmatprep.mubr.bf16.mxu0 0
      %662 = vmatmul.mubr.bf16.gmra.mxu0 %v623
      %v663 = vpop.f32.mrf.mxu0
      %v664 = vadd.f32 %v620, %v663
      %v665 = vpop.f32.mrf.mxu0
      %v666 = vpop.f32.mrf.mxu0
      %v667 = vpop.f32.mrf.mxu0
      %668 = vdwg.mxu0
      %v669 = vmax.f32 %v664, 0.0
      %v670 = vpack.c.bf16 %v669, %v669
      %v671 = vld [vmem:[%s2] sm:$0x3]
      %v674 = vunpack.c.l.s4 1966171168
      %v675 = vunpack.c.0.s8 %v674
      %v676 = vlaneseq
      %v677 = vshrl.u32 %v676, 7
      %v678 = vsub.s32 %v675, %v677
      %v679 = vrot.slane %v671, %v678
      %v680 = vcombine.high %v679, %v679
      %v682 = vunpack.c.l.s4 1966171168
      %v683 = vunpack.c.0.s8 %v682
      %v684 = vlaneseq
      %v685 = vshrl.u32 %v684, 7
      %v686 = vsub.s32 %v683, %v685
      %v687 = vrot.slane %v679, %v686
      %v689 = vunpack.c.l.s4 1966171168
      %v690 = vunpack.c.0.s8 %v689
      %v691 = vlaneseq
      %v692 = vshrl.u32 %v691, 7
      %v693 = vsub.s32 %v690, %v692
      %v694 = vrot.slane %v680, %v693
      %vm695 = vcmask 7168
      %v697 = vsel %vm695, %v670, 0
      %vm699 = vcmask 1040384
      %v700 = vsel 0, 4294967295, 65535
      %v701 = vsel %vm699, %v700, 0
      %v703 = vand.u32 %v687, %v701
      %v706 = vand.u32 %v694, %v701
      %708 = vmatprep.subr.bf16.mxu0 0
      %709 = vmatpush1.bf16.msra.mxu0 0
      %710 = vmatprep.subr.bf16.mxu0 0
      %711 = vmatpush1.bf16.msra.mxu0 0
      %712 = vmatprep.subr.bf16.mxu0 0
      %713 = vmatpush1.bf16.msra.mxu0 0
      %714 = vmatprep.subr.bf16.mxu0 0
      %715 = vmatpush1.bf16.msra.mxu0 0
      %716 = vmatprep.subr.bf16.mxu0 0
      %717 = vmatpush1.bf16.msra.mxu0 0
      %718 = vmatprep.subr.bf16.mxu0 0
      %719 = vmatpush1.bf16.msra.mxu0 0
      %720 = vmatprep.subr.bf16.mxu0 0
      %721 = vmatpush1.bf16.msra.mxu0 0
      %722 = vmatprep.subr.bf16.mxu0 %v706
      %723 = vmatpush1.bf16.msra.mxu0 %v703
      %724 = vmatprep.subr.bf16.mxu0 0
      %725 = vmatpush2.bf16.msra.mxu0 0
      %726 = vmatprep.subr.bf16.mxu0 0
      %727 = vmatpush2.bf16.msra.mxu0 0
      %728 = vmatprep.subr.bf16.mxu0 0
      %729 = vmatpush2.bf16.msra.mxu0 0
      %730 = vmatprep.subr.bf16.mxu0 0
      %731 = vmatpush2.bf16.msra.mxu0 0
      %732 = vmatprep.subr.bf16.mxu0 0
      %733 = vmatpush2.bf16.msra.mxu0 0
      %734 = vmatprep.subr.bf16.mxu0 0
      %735 = vmatpush2.bf16.msra.mxu0 0
      %736 = vmatprep.subr.bf16.mxu0 0
      %737 = vmatpush2.bf16.msra.mxu0 0
      %738 = vmatprep.subr.bf16.mxu0 0
      %739 = vmatpush2.bf16.msra.mxu0 0
      %740 = vmatprep.mubr.bf16.mxu0 0
      %741 = vmatmul.mubr.bf16.gmra.mxu0 %v697
      %v742 = vpop.f32.mrf.mxu0
      %v743 = vadd.f32 0.0, %v742
      %v744 = vpop.f32.mrf.mxu0
      %v745 = vadd.f32 0.0, %v744
      %v746 = vpop.f32.mrf.mxu0
      %v747 = vpop.f32.mrf.mxu0
      %748 = vdwg.mxu0
      %v751 = vrot.slane %v743, 4
      %v752 = vrot.slane %v745, 4
      %755 = vst [vmem:[%s440] sm:$0xf0] %v751
      %756 = vst [vmem:[%s440 + $0x8] sm:$0xf0] %v752
      %757 = vst [vmem:[%s440 + $0x10] sm:$0xf] %v751
      %758 = vst [vmem:[%s440 + $0x18] sm:$0xf] %v752
      %v759 = vld [vmem:[%s5] sm:$0xf]
      %v760 = vld [vmem:[%s5 + $0x4] sm:$0xf]
      %v761 = vld [vmem:[%s5 + $0x8] sm:$0xf]
      %v762 = vld [vmem:[%s5 + $0xc] sm:$0xf]
      %v763 = vld [vmem:[%s5 + $0x10] sm:$0xf]
      %v764 = vld [vmem:[%s5 + $0x14] sm:$0xf]
      %v765 = vld [vmem:[%s5 + $0x18] sm:$0xf]
      %v766 = vld [vmem:[%s5 + $0x1c] sm:$0xf]
      %v767 = vld [vmem:[%s5 + $0x20] sm:$0xf]
      %v768 = vld [vmem:[%s5 + $0x24] sm:$0xf]
      %v769 = vld [vmem:[%s5 + $0x28] sm:$0xf]
      %v770 = vld [vmem:[%s5 + $0x2c] sm:$0xf]
      %v771 = vld [vmem:[%s5 + $0x30] sm:$0xf]
      %v772 = vld [vmem:[%s5 + $0x34] sm:$0xf]
      %v773 = vld [vmem:[%s5 + $0x38] sm:$0xf]
      %v774 = vld [vmem:[%s5 + $0x3c] sm:$0xf]
      %v775 = vld [vmem:[%s5 + $0x40] sm:$0xf]
      %v776 = vld [vmem:[%s5 + $0x44] sm:$0xf]
      %v777 = vld [vmem:[%s5 + $0x48] sm:$0xf]
      %v778 = vld [vmem:[%s5 + $0x4c] sm:$0xf]
      %v779 = vld [vmem:[%s5 + $0x50] sm:$0xf]
      %v780 = vld [vmem:[%s5 + $0x54] sm:$0xf]
      %v781 = vld [vmem:[%s5 + $0x58] sm:$0xf]
      %v782 = vld [vmem:[%s5 + $0x5c] sm:$0xf]
      %v783 = vld [vmem:[%s5 + $0x60] sm:$0xf]
      %v784 = vld [vmem:[%s5 + $0x64] sm:$0xf]
      %v785 = vld [vmem:[%s5 + $0x68] sm:$0xf]
      %v786 = vld [vmem:[%s5 + $0x6c] sm:$0xf]
      %v787 = vld [vmem:[%s5 + $0x70] sm:$0xf]
      %v788 = vld [vmem:[%s5 + $0x74] sm:$0xf]
      %v789 = vld [vmem:[%s5 + $0x78] sm:$0xf]
      %v790 = vld [vmem:[%s5 + $0x7c] sm:$0xf]
      %v823 = vunpack.c.l.b16 %v759
      %v824 = vunpack.c.l.b16 %v760
      %v825 = vunpack.c.l.b16 %v761
      %v826 = vunpack.c.l.b16 %v762
      %v827 = vunpack.c.l.b16 %v763
      %v828 = vunpack.c.l.b16 %v764
      %v829 = vunpack.c.l.b16 %v765
      %v830 = vunpack.c.l.b16 %v766
      %v831 = vunpack.c.l.b16 %v767
      %v832 = vunpack.c.l.b16 %v768
      %v833 = vunpack.c.l.b16 %v769
      %v834 = vunpack.c.l.b16 %v770
      %v835 = vunpack.c.l.b16 %v771
      %v836 = vunpack.c.l.b16 %v772
      %v837 = vunpack.c.l.b16 %v773
      %v838 = vunpack.c.l.b16 %v774
      %v839 = vunpack.c.l.b16 %v775
      %v840 = vunpack.c.l.b16 %v776
      %v841 = vunpack.c.l.b16 %v777
      %v842 = vunpack.c.l.b16 %v778
      %v843 = vunpack.c.l.b16 %v779
      %v844 = vunpack.c.l.b16 %v780
      %v845 = vunpack.c.l.b16 %v781
      %v846 = vunpack.c.l.b16 %v782
      %v847 = vunpack.c.l.b16 %v783
      %v848 = vunpack.c.l.b16 %v784
      %v849 = vunpack.c.l.b16 %v785
      %v850 = vunpack.c.l.b16 %v786
      %v851 = vunpack.c.l.b16 %v787
      %v852 = vunpack.c.l.b16 %v788
      %v853 = vunpack.c.l.b16 %v789
      %v854 = vunpack.c.l.b16 %v790
      %v855 = vpack.c.b16 %v824, %v823
      %v856 = vpack.c.b16 %v826, %v825
      %v857 = vpack.c.b16 %v828, %v827
      %v858 = vpack.c.b16 %v830, %v829
      %v859 = vpack.c.b16 %v832, %v831
      %v860 = vpack.c.b16 %v834, %v833
      %v861 = vpack.c.b16 %v836, %v835
      %v862 = vpack.c.b16 %v838, %v837
      %v863 = vpack.c.b16 %v840, %v839
      %v864 = vpack.c.b16 %v842, %v841
      %v865 = vpack.c.b16 %v844, %v843
      %v866 = vpack.c.b16 %v846, %v845
      %v867 = vpack.c.b16 %v848, %v847
      %v868 = vpack.c.b16 %v850, %v849
      %v869 = vpack.c.b16 %v852, %v851
      %v870 = vpack.c.b16 %v854, %v853
      %887 = vmatprep.subr.bf16.mxu0 0
      %888 = vmatpush1.bf16.msra.mxu0 %v862
      %889 = vmatprep.subr.bf16.mxu0 0
      %890 = vmatpush1.bf16.msra.mxu0 %v861
      %891 = vmatprep.subr.bf16.mxu0 0
      %892 = vmatpush1.bf16.msra.mxu0 %v860
      %893 = vmatprep.subr.bf16.mxu0 0
      %894 = vmatpush1.bf16.msra.mxu0 %v859
      %895 = vmatprep.subr.bf16.mxu0 0
      %896 = vmatpush1.bf16.msra.mxu0 %v858
      %897 = vmatprep.subr.bf16.mxu0 0
      %898 = vmatpush1.bf16.msra.mxu0 %v857
      %899 = vmatprep.subr.bf16.mxu0 0
      %900 = vmatpush1.bf16.msra.mxu0 %v856
      %901 = vmatprep.subr.bf16.mxu0 0
      %902 = vmatpush1.bf16.msra.mxu0 %v855
      %903 = vmatprep.subr.bf16.mxu0 0
      %904 = vmatpush2.bf16.msra.mxu0 %v870
      %905 = vmatprep.subr.bf16.mxu0 0
      %906 = vmatpush2.bf16.msra.mxu0 %v869
      %907 = vmatprep.subr.bf16.mxu0 0
      %908 = vmatpush2.bf16.msra.mxu0 %v868
      %909 = vmatprep.subr.bf16.mxu0 0
      %910 = vmatpush2.bf16.msra.mxu0 %v867
      %911 = vmatprep.subr.bf16.mxu0 0
      %912 = vmatpush2.bf16.msra.mxu0 %v866
      %913 = vmatprep.subr.bf16.mxu0 0
      %914 = vmatpush2.bf16.msra.mxu0 %v865
      %915 = vmatprep.subr.bf16.mxu0 0
      %916 = vmatpush2.bf16.msra.mxu0 %v864
      %917 = vmatprep.subr.bf16.mxu0 0
      %918 = vmatpush2.bf16.msra.mxu0 %v863
      %919 = vmatprep.mubr.bf16.mxu0 %v449
      %920 = vmatmul.mubr.bf16.gmra.mxu0 %v448
      %v921 = vpop.f32.mrf.mxu0
      %v922 = vadd.f32 0.0, %v921
      %v923 = vpop.f32.mrf.mxu0
      %v924 = vpop.f32.mrf.mxu0
      %v925 = vpop.f32.mrf.mxu0
      %926 = vdwg.mxu0
      %v927 = vld [vmem:[%s7] sm:$0xf]
      %v928 = vpack.c.bf16 %v922, %v922
      %v929 = vld [vmem:[%s8] sm:$0xff]
      %931 = vset.pattern.permute.xlu0 0
      %932 = vperm.xlu0 %931, %v929
      %v933 = vpop.permute.xlu0 %932
      %v936 = vsel %vm621, %v927, 0
      %v939 = vsel %vm625, %v928, 0
      %941 = vmatprep.subr.bf16.mxu0 0
      %942 = vmatpush1.bf16.msra.mxu0 0
      %943 = vmatprep.subr.bf16.mxu0 0
      %944 = vmatpush1.bf16.msra.mxu0 0
      %945 = vmatprep.subr.bf16.mxu0 0
      %946 = vmatpush1.bf16.msra.mxu0 0
      %947 = vmatprep.subr.bf16.mxu0 0
      %948 = vmatpush1.bf16.msra.mxu0 0
      %949 = vmatprep.subr.bf16.mxu0 0
      %950 = vmatpush1.bf16.msra.mxu0 0
      %951 = vmatprep.subr.bf16.mxu0 0
      %952 = vmatpush1.bf16.msra.mxu0 0
      %953 = vmatprep.subr.bf16.mxu0 0
      %954 = vmatpush1.bf16.msra.mxu0 0
      %955 = vmatprep.subr.bf16.mxu0 0
      %956 = vmatpush1.bf16.msra.mxu0 %v939
      %957 = vmatprep.subr.bf16.mxu0 0
      %958 = vmatpush2.bf16.msra.mxu0 0
      %959 = vmatprep.subr.bf16.mxu0 0
      %960 = vmatpush2.bf16.msra.mxu0 0
      %961 = vmatprep.subr.bf16.mxu0 0
      %962 = vmatpush2.bf16.msra.mxu0 0
      %963 = vmatprep.subr.bf16.mxu0 0
      %964 = vmatpush2.bf16.msra.mxu0 0
      %965 = vmatprep.subr.bf16.mxu0 0
      %966 = vmatpush2.bf16.msra.mxu0 0
      %967 = vmatprep.subr.bf16.mxu0 0
      %968 = vmatpush2.bf16.msra.mxu0 0
      %969 = vmatprep.subr.bf16.mxu0 0
      %970 = vmatpush2.bf16.msra.mxu0 0
      %971 = vmatprep.subr.bf16.mxu0 0
      %972 = vmatpush2.bf16.msra.mxu0 0
      %973 = vmatprep.mubr.bf16.mxu0 0
      %974 = vmatmul.mubr.bf16.gmra.mxu0 %v936
      %v975 = vpop.f32.mrf.mxu0
      %v976 = vadd.f32 %v933, %v975
      %v977 = vpop.f32.mrf.mxu0
      %v978 = vpop.f32.mrf.mxu0
      %v979 = vpop.f32.mrf.mxu0
      %980 = vdwg.mxu0
      %v981 = vmax.f32 %v976, 0.0
      %v982 = vpack.c.bf16 %v981, %v981
      %v983 = vld [vmem:[%s6] sm:$0xf]
      %v986 = vunpack.c.l.s4 1983009808
      %v987 = vunpack.c.0.s8 %v986
      %v988 = vlaneseq
      %v989 = vshrl.u32 %v988, 7
      %v990 = vsub.s32 %v987, %v989
      %v991 = vrot.slane %v983, %v990
      %v992 = vcombine.high %v991, %v991
      %v994 = vsel %vm621, %v982, 0
      %v997 = vsel %vm625, %v991, 0
      %v1000 = vsel %vm625, %v992, 0
      %1002 = vmatprep.subr.bf16.mxu0 0
      %1003 = vmatpush1.bf16.msra.mxu0 0
      %1004 = vmatprep.subr.bf16.mxu0 0
      %1005 = vmatpush1.bf16.msra.mxu0 0
      %1006 = vmatprep.subr.bf16.mxu0 0
      %1007 = vmatpush1.bf16.msra.mxu0 0
      %1008 = vmatprep.subr.bf16.mxu0 0
      %1009 = vmatpush1.bf16.msra.mxu0 0
      %1010 = vmatprep.subr.bf16.mxu0 0
      %1011 = vmatpush1.bf16.msra.mxu0 0
      %1012 = vmatprep.subr.bf16.mxu0 0
      %1013 = vmatpush1.bf16.msra.mxu0 0
      %1014 = vmatprep.subr.bf16.mxu0 0
      %1015 = vmatpush1.bf16.msra.mxu0 0
      %1016 = vmatprep.subr.bf16.mxu0 %v1000
      %1017 = vmatpush1.bf16.msra.mxu0 %v997
      %1018 = vmatprep.subr.bf16.mxu0 0
      %1019 = vmatpush2.bf16.msra.mxu0 0
      %1020 = vmatprep.subr.bf16.mxu0 0
      %1021 = vmatpush2.bf16.msra.mxu0 0
      %1022 = vmatprep.subr.bf16.mxu0 0
      %1023 = vmatpush2.bf16.msra.mxu0 0
      %1024 = vmatprep.subr.bf16.mxu0 0
      %1025 = vmatpush2.bf16.msra.mxu0 0
      %1026 = vmatprep.subr.bf16.mxu0 0
      %1027 = vmatpush2.bf16.msra.mxu0 0
      %1028 = vmatprep.subr.bf16.mxu0 0
      %1029 = vmatpush2.bf16.msra.mxu0 0
      %1030 = vmatprep.subr.bf16.mxu0 0
      %1031 = vmatpush2.bf16.msra.mxu0 0
      %1032 = vmatprep.subr.bf16.mxu0 0
      %1033 = vmatpush2.bf16.msra.mxu0 0
      %1034 = vmatprep.mubr.bf16.mxu0 0
      %1035 = vmatmul.mubr.bf16.gmra.mxu0 %v994
      %v1036 = vpop.f32.mrf.mxu0
      %v1037 = vadd.f32 0.0, %v1036
      %v1038 = vpop.f32.mrf.mxu0
      %v1039 = vadd.f32 0.0, %v1038
      %v1040 = vpop.f32.mrf.mxu0
      %v1041 = vpop.f32.mrf.mxu0
      %1042 = vdwg.mxu0
      %v1045 = vrot.slane %v1037, 4
      %v1046 = vrot.slane %v1039, 4
      %1049 = vst [vmem:[%s440 + $0x10] sm:$0xf0] %v1045
      %1050 = vst [vmem:[%s440 + $0x18] sm:$0xf0] %v1046
      %1051 = vst [vmem:[%s440 + $0x20] sm:$0xf] %v1045
      %1052 = vst [vmem:[%s440 + $0x28] sm:$0xf] %v1046
      %v1053 = vld [vmem:[%s9] sm:$0xf]
      %v1054 = vld [vmem:[%s9 + $0x4] sm:$0xf]
      %v1055 = vld [vmem:[%s9 + $0x8] sm:$0xf]
      %v1056 = vld [vmem:[%s9 + $0xc] sm:$0xf]
      %v1057 = vld [vmem:[%s9 + $0x10] sm:$0xf]
      %v1058 = vld [vmem:[%s9 + $0x14] sm:$0xf]
      %v1059 = vld [vmem:[%s9 + $0x18] sm:$0xf]
      %v1060 = vld [vmem:[%s9 + $0x1c] sm:$0xf]
      %v1061 = vld [vmem:[%s9 + $0x20] sm:$0xf]
      %v1062 = vld [vmem:[%s9 + $0x24] sm:$0xf]
      %v1063 = vld [vmem:[%s9 + $0x28] sm:$0xf]
      %v1064 = vld [vmem:[%s9 + $0x2c] sm:$0xf]
      %v1065 = vld [vmem:[%s9 + $0x30] sm:$0xf]
      %v1066 = vld [vmem:[%s9 + $0x34] sm:$0xf]
      %v1067 = vld [vmem:[%s9 + $0x38] sm:$0xf]
      %v1068 = vld [vmem:[%s9 + $0x3c] sm:$0xf]
      %v1069 = vld [vmem:[%s9 + $0x40] sm:$0xf]
      %v1070 = vld [vmem:[%s9 + $0x44] sm:$0xf]
      %v1071 = vld [vmem:[%s9 + $0x48] sm:$0xf]
      %v1072 = vld [vmem:[%s9 + $0x4c] sm:$0xf]
      %v1073 = vld [vmem:[%s9 + $0x50] sm:$0xf]
      %v1074 = vld [vmem:[%s9 + $0x54] sm:$0xf]
      %v1075 = vld [vmem:[%s9 + $0x58] sm:$0xf]
      %v1076 = vld [vmem:[%s9 + $0x5c] sm:$0xf]
      %v1077 = vld [vmem:[%s9 + $0x60] sm:$0xf]
      %v1078 = vld [vmem:[%s9 + $0x64] sm:$0xf]
      %v1079 = vld [vmem:[%s9 + $0x68] sm:$0xf]
      %v1080 = vld [vmem:[%s9 + $0x6c] sm:$0xf]
      %v1081 = vld [vmem:[%s9 + $0x70] sm:$0xf]
      %v1082 = vld [vmem:[%s9 + $0x74] sm:$0xf]
      %v1083 = vld [vmem:[%s9 + $0x78] sm:$0xf]
      %v1084 = vld [vmem:[%s9 + $0x7c] sm:$0xf]
      %v1117 = vunpack.c.l.b16 %v1053
      %v1118 = vunpack.c.l.b16 %v1054
      %v1119 = vunpack.c.l.b16 %v1055
      %v1120 = vunpack.c.l.b16 %v1056
      %v1121 = vunpack.c.l.b16 %v1057
      %v1122 = vunpack.c.l.b16 %v1058
      %v1123 = vunpack.c.l.b16 %v1059
      %v1124 = vunpack.c.l.b16 %v1060
      %v1125 = vunpack.c.l.b16 %v1061
      %v1126 = vunpack.c.l.b16 %v1062
      %v1127 = vunpack.c.l.b16 %v1063
      %v1128 = vunpack.c.l.b16 %v1064
      %v1129 = vunpack.c.l.b16 %v1065
      %v1130 = vunpack.c.l.b16 %v1066
      %v1131 = vunpack.c.l.b16 %v1067
      %v1132 = vunpack.c.l.b16 %v1068
      %v1133 = vunpack.c.l.b16 %v1069
      %v1134 = vunpack.c.l.b16 %v1070
      %v1135 = vunpack.c.l.b16 %v1071
      %v1136 = vunpack.c.l.b16 %v1072
      %v1137 = vunpack.c.l.b16 %v1073
      %v1138 = vunpack.c.l.b16 %v1074
      %v1139 = vunpack.c.l.b16 %v1075
      %v1140 = vunpack.c.l.b16 %v1076
      %v1141 = vunpack.c.l.b16 %v1077
      %v1142 = vunpack.c.l.b16 %v1078
      %v1143 = vunpack.c.l.b16 %v1079
      %v1144 = vunpack.c.l.b16 %v1080
      %v1145 = vunpack.c.l.b16 %v1081
      %v1146 = vunpack.c.l.b16 %v1082
      %v1147 = vunpack.c.l.b16 %v1083
      %v1148 = vunpack.c.l.b16 %v1084
      %v1149 = vpack.c.b16 %v1118, %v1117
      %v1150 = vpack.c.b16 %v1120, %v1119
      %v1151 = vpack.c.b16 %v1122, %v1121
      %v1152 = vpack.c.b16 %v1124, %v1123
      %v1153 = vpack.c.b16 %v1126, %v1125
      %v1154 = vpack.c.b16 %v1128, %v1127
      %v1155 = vpack.c.b16 %v1130, %v1129
      %v1156 = vpack.c.b16 %v1132, %v1131
      %v1157 = vpack.c.b16 %v1134, %v1133
      %v1158 = vpack.c.b16 %v1136, %v1135
      %v1159 = vpack.c.b16 %v1138, %v1137
      %v1160 = vpack.c.b16 %v1140, %v1139
      %v1161 = vpack.c.b16 %v1142, %v1141
      %v1162 = vpack.c.b16 %v1144, %v1143
      %v1163 = vpack.c.b16 %v1146, %v1145
      %v1164 = vpack.c.b16 %v1148, %v1147
      %1181 = vmatprep.subr.bf16.mxu0 0
      %1182 = vmatpush1.bf16.msra.mxu0 %v1156
      %1183 = vmatprep.subr.bf16.mxu0 0
      %1184 = vmatpush1.bf16.msra.mxu0 %v1155
      %1185 = vmatprep.subr.bf16.mxu0 0
      %1186 = vmatpush1.bf16.msra.mxu0 %v1154
      %1187 = vmatprep.subr.bf16.mxu0 0
      %1188 = vmatpush1.bf16.msra.mxu0 %v1153
      %1189 = vmatprep.subr.bf16.mxu0 0
      %1190 = vmatpush1.bf16.msra.mxu0 %v1152
      %1191 = vmatprep.subr.bf16.mxu0 0
      %1192 = vmatpush1.bf16.msra.mxu0 %v1151
      %1193 = vmatprep.subr.bf16.mxu0 0
      %1194 = vmatpush1.bf16.msra.mxu0 %v1150
      %1195 = vmatprep.subr.bf16.mxu0 0
      %1196 = vmatpush1.bf16.msra.mxu0 %v1149
      %1197 = vmatprep.subr.bf16.mxu0 0
      %1198 = vmatpush2.bf16.msra.mxu0 %v1164
      %1199 = vmatprep.subr.bf16.mxu0 0
      %1200 = vmatpush2.bf16.msra.mxu0 %v1163
      %1201 = vmatprep.subr.bf16.mxu0 0
      %1202 = vmatpush2.bf16.msra.mxu0 %v1162
      %1203 = vmatprep.subr.bf16.mxu0 0
      %1204 = vmatpush2.bf16.msra.mxu0 %v1161
      %1205 = vmatprep.subr.bf16.mxu0 0
      %1206 = vmatpush2.bf16.msra.mxu0 %v1160
      %1207 = vmatprep.subr.bf16.mxu0 0
      %1208 = vmatpush2.bf16.msra.mxu0 %v1159
      %1209 = vmatprep.subr.bf16.mxu0 0
      %1210 = vmatpush2.bf16.msra.mxu0 %v1158
      %1211 = vmatprep.subr.bf16.mxu0 0
      %1212 = vmatpush2.bf16.msra.mxu0 %v1157
      %1213 = vmatprep.mubr.bf16.mxu0 %v449
      %1214 = vmatmul.mubr.bf16.gmra.mxu0 %v448
      %v1215 = vpop.f32.mrf.mxu0
      %v1216 = vadd.f32 0.0, %v1215
      %v1217 = vpop.f32.mrf.mxu0
      %v1218 = vpop.f32.mrf.mxu0
      %v1219 = vpop.f32.mrf.mxu0
      %1220 = vdwg.mxu0
      %v1221 = vld [vmem:[%s11] sm:$0xf]
      %v1222 = vpack.c.bf16 %v1216, %v1216
      %v1223 = vld [vmem:[%s12] sm:$0xff]
      %1225 = vset.pattern.permute.xlu0 0
      %1226 = vperm.xlu0 %1225, %v1223
      %v1227 = vpop.permute.xlu0 %1226
      %v1230 = vsel %vm621, %v1221, 0
      %v1233 = vsel %vm625, %v1222, 0
      %1235 = vmatprep.subr.bf16.mxu0 0
      %1236 = vmatpush1.bf16.msra.mxu0 0
      %1237 = vmatprep.subr.bf16.mxu0 0
      %1238 = vmatpush1.bf16.msra.mxu0 0
      %1239 = vmatprep.subr.bf16.mxu0 0
      %1240 = vmatpush1.bf16.msra.mxu0 0
      %1241 = vmatprep.subr.bf16.mxu0 0
      %1242 = vmatpush1.bf16.msra.mxu0 0
      %1243 = vmatprep.subr.bf16.mxu0 0
      %1244 = vmatpush1.bf16.msra.mxu0 0
      %1245 = vmatprep.subr.bf16.mxu0 0
      %1246 = vmatpush1.bf16.msra.mxu0 0
      %1247 = vmatprep.subr.bf16.mxu0 0
      %1248 = vmatpush1.bf16.msra.mxu0 0
      %1249 = vmatprep.subr.bf16.mxu0 0
      %1250 = vmatpush1.bf16.msra.mxu0 %v1233
      %1251 = vmatprep.subr.bf16.mxu0 0
      %1252 = vmatpush2.bf16.msra.mxu0 0
      %1253 = vmatprep.subr.bf16.mxu0 0
      %1254 = vmatpush2.bf16.msra.mxu0 0
      %1255 = vmatprep.subr.bf16.mxu0 0
      %1256 = vmatpush2.bf16.msra.mxu0 0
      %1257 = vmatprep.subr.bf16.mxu0 0
      %1258 = vmatpush2.bf16.msra.mxu0 0
      %1259 = vmatprep.subr.bf16.mxu0 0
      %1260 = vmatpush2.bf16.msra.mxu0 0
      %1261 = vmatprep.subr.bf16.mxu0 0
      %1262 = vmatpush2.bf16.msra.mxu0 0
      %1263 = vmatprep.subr.bf16.mxu0 0
      %1264 = vmatpush2.bf16.msra.mxu0 0
      %1265 = vmatprep.subr.bf16.mxu0 0
      %1266 = vmatpush2.bf16.msra.mxu0 0
      %1267 = vmatprep.mubr.bf16.mxu0 0
      %1268 = vmatmul.mubr.bf16.gmra.mxu0 %v1230
      %v1269 = vpop.f32.mrf.mxu0
      %v1270 = vadd.f32 %v1227, %v1269
      %v1271 = vpop.f32.mrf.mxu0
      %v1272 = vpop.f32.mrf.mxu0
      %v1273 = vpop.f32.mrf.mxu0
      %1274 = vdwg.mxu0
      %v1275 = vmax.f32 %v1270, 0.0
      %v1276 = vpack.c.bf16 %v1275, %v1275
      %v1277 = vld [vmem:[%s10] sm:$0xff]
      %v1278 = vld [vmem:[%s10 + $0x8] sm:$0xff]
      %v1281 = vunpack.c.l.b16 %v1277
      %v1282 = vunpack.c.h.b16 %v1277
      %v1283 = vunpack.c.l.b16 %v1278
      %v1284 = vunpack.c.h.b16 %v1278
      %v1285 = vpack.c.b16 %v1283, %v1281
      %v1286 = vpack.c.b16 %v1284, %v1282
      %vm1289 = vcmask 130048
      %v1291 = vsel %vm1289, %v1276, 0
      %1293 = vmatprep.subr.bf16.mxu0 0
      %1294 = vmatpush1.bf16.msra.mxu0 0
      %1295 = vmatprep.subr.bf16.mxu0 0
      %1296 = vmatpush1.bf16.msra.mxu0 0
      %1297 = vmatprep.subr.bf16.mxu0 0
      %1298 = vmatpush1.bf16.msra.mxu0 0
      %1299 = vmatprep.subr.bf16.mxu0 0
      %1300 = vmatpush1.bf16.msra.mxu0 0
      %1301 = vmatprep.subr.bf16.mxu0 0
      %1302 = vmatpush1.bf16.msra.mxu0 0
      %1303 = vmatprep.subr.bf16.mxu0 0
      %1304 = vmatpush1.bf16.msra.mxu0 0
      %1305 = vmatprep.subr.bf16.mxu0 0
      %1306 = vmatpush1.bf16.msra.mxu0 0
      %1307 = vmatprep.subr.bf16.mxu0 %v1286
      %1308 = vmatpush1.bf16.msra.mxu0 %v1285
      %1309 = vmatprep.subr.bf16.mxu0 0
      %1310 = vmatpush2.bf16.msra.mxu0 0
      %1311 = vmatprep.subr.bf16.mxu0 0
      %1312 = vmatpush2.bf16.msra.mxu0 0
      %1313 = vmatprep.subr.bf16.mxu0 0
      %1314 = vmatpush2.bf16.msra.mxu0 0
      %1315 = vmatprep.subr.bf16.mxu0 0
      %1316 = vmatpush2.bf16.msra.mxu0 0
      %1317 = vmatprep.subr.bf16.mxu0 0
      %1318 = vmatpush2.bf16.msra.mxu0 0
      %1319 = vmatprep.subr.bf16.mxu0 0
      %1320 = vmatpush2.bf16.msra.mxu0 0
      %1321 = vmatprep.subr.bf16.mxu0 0
      %1322 = vmatpush2.bf16.msra.mxu0 0
      %1323 = vmatprep.subr.bf16.mxu0 0
      %1324 = vmatpush2.bf16.msra.mxu0 0
      %1325 = vmatprep.mubr.bf16.mxu0 0
      %1326 = vmatmul.mubr.bf16.gmra.mxu0 %v1291
      %v1327 = vpop.f32.mrf.mxu0
      %v1328 = vadd.f32 0.0, %v1327
      %v1329 = vpop.f32.mrf.mxu0
      %v1330 = vadd.f32 0.0, %v1329
      %v1331 = vpop.f32.mrf.mxu0
      %v1332 = vpop.f32.mrf.mxu0
      %1333 = vdwg.mxu0
      %v1336 = vrot.slane %v1328, 4
      %v1337 = vrot.slane %v1330, 4
      %1340 = vst [vmem:[%s440 + $0x20] sm:$0xf0] %v1336
      %1341 = vst [vmem:[%s440 + $0x28] sm:$0xf0] %v1337
      %1342 = vst [vmem:[%s440 + $0x30] sm:$0xf] %v1336
      %1343 = vst [vmem:[%s440 + $0x38] sm:$0xf] %v1337
      %p1344 = scmp.lt.s32.totalorder %s24, 1
      %s1345 = scalar_select %p1344, %s24, 1
      %s1346 = smul.addr %s1345, 8
      %s1347 = smul.addr %s1346, 8
      %s1348 = scalar_lea.vmem %s13, %s1347
      // Predicated region
      $region73: #{tpu_custom_call.1} parent=71 // pred_check
        %p1349 = pneg %p320
      $region74: #{tpu_custom_call.1} parent=71 // pred_check_branch
        %1351 = sbr.rel (%p1349) target = $region76
      $region75: #{tpu_custom_call.1} parent=71 // pred_region
        _
      $region76: #{tpu_custom_call.1} parent=71 // pred_fallthru
        _
    $region72: #{tpu_custom_call.1} parent=5 // pred_fallthru
      _
    %p1352 = scmp.le.s32.totalorder 2, %s19
    // Predicated region
    $region77: #{tpu_custom_call.1} parent=5 // pred_check
      %p1353 = pneg %p1352
    $region78: #{tpu_custom_call.1} parent=5 // pred_check_branch
      %1355 = sbr.rel (%p1353) target = $region80
    $region79: #{tpu_custom_call.1} parent=5 // pred_region
      %s1356 = ssub.s32 %s19, 2
      // Predicated region
      $region81: #{tpu_custom_call.1} parent=79 // pred_check
        %p1357 = pneg %p326
      $region82: #{tpu_custom_call.1} parent=79 // pred_check_branch
        %1359 = sbr.rel (%p1357) target = $region84
      $region83: #{tpu_custom_call.1} parent=79 // pred_region
        %p1360 = scmp.lt.s32.totalorder %s25, 1
        %s1361 = scalar_select %p1360, %s25, 1
        %s1362 = smul.addr %s1361, 8
        %s1363 = smul.addr %s1362, 8
        %s1364 = scalar_lea.vmem %s13, %s1363
      $region84: #{tpu_custom_call.1} parent=79 // pred_fallthru
        _
    $region80: #{tpu_custom_call.1} parent=5 // pred_fallthru
      _
  $region6: #{tpu_custom_call.1} parent=0 // loop_footer
    %s23 = sadd.s32 1, %s19
  $region7: #{tpu_custom_call.1} parent=0 // loop_footer_branch
    %18 = sbr.rel target = $region3
  $region8: #{tpu_custom_call.1} parent=0 // loop_exit
    _

</llo_original>
